<compile_context>
chip_gen: v6e
topology: v6e:2x2x1
jax: 0.10.0
libtpu: 0.0.40
codegen_flags: <defaults>
</compile_context>

<pallas_src>
import jax
import jax.numpy as jnp
from jax.experimental import pallas as pl
from jax.experimental.pallas import tpu as pltpu

# ----------------------------- config (synthetic) ----------------------------
IN_CH = 3          # encoder input channels
FEAT_CH = 8        # encoder output (feature) channels
HIDDEN = 32        # imnet hidden width (2 hidden layers, ReLU)
OUT_CH = 3         # imnet output channels (RGB)
OUT_PAD = 8        # lane-padded output width written by the kernel
FAT_EPS = 0.01     # fat_tanh eps
ENS = 4            # local-ensemble size

# TODO(synk): encoder_spec / imnet_spec are abstract in the reference; replaced
# here with a synthetic 3x3 conv encoder and a 2-hidden-layer ReLU MLP imnet.


def _round_up(x, m):
    return ((x + m - 1) // m) * m


# ============================ Pallas kernel bodies ============================

def _enc_matmul_kernel(p_ref, w_ref, b_ref, o_ref):
    """im2col'd 3x3 conv as a matmul, fused bias + tanh (gen_feat)."""
    acc = jnp.dot(p_ref[...], w_ref[...], preferred_element_type=jnp.float32)
    o_ref[...] = jnp.tanh(acc + b_ref[...])


def _imnet_kernel(inp_ref, area_ref,
                  w1_ref, b1_ref, w2_ref, b2_ref, w3_ref, b3_ref,
                  o_ref):
    """imnet MLP for all 4 ensemble members of one query tile.

    The ensemble axis is folded into the row dim so each layer is ONE
    (4*tn, .) x (., .) MXU matmul; the area-weighted reduction over the 4
    members and the fat_tanh epilogue are fused into the same grid step.
    """
    e, tn, din = inp_ref.shape
    n_out = o_ref.shape[-1]

    x = inp_ref[...].reshape(e * tn, din)                    # bf16, contiguous merge
    w1 = w1_ref[...]; b1 = b1_ref[...]
    w2 = w2_ref[...]; b2 = b2_ref[...]
    w3 = w3_ref[...]; b3 = b3_ref[...]

    h = jnp.dot(x, w1, preferred_element_type=jnp.float32) + b1
    h = jnp.maximum(h, 0.0).astype(jnp.bfloat16)
    h = jnp.dot(h, w2, preferred_element_type=jnp.float32) + b2
    h = jnp.maximum(h, 0.0).astype(jnp.bfloat16)
    y = jnp.dot(h, w3, preferred_element_type=jnp.float32) + b3      # (e*tn, n_out)

    y = y.reshape(e, tn, n_out) * area_ref[...]                      # (e,tn,8)*(e,tn,1)
    acc = jnp.sum(y, axis=0)                                         # (tn, n_out)
    # fat_tanh(v) = tanh(v) * (1 + eps); padded lanes stay 0.
    o_ref[...] = jnp.tanh(acc) * (1.0 + FAT_EPS)


# =============================== kernel wrappers ==============================

def encoder_conv_tanh(x_nhwc, w_enc, b_enc, tm_max=1024):
    """3x3 same-padding conv + tanh via im2col + Pallas matmul kernel."""
    B, H, W, Cin = x_nhwc.shape
    Cout = w_enc.shape[-1]
    K = 9 * Cin
    N = B * H * W
    tm = min(tm_max, _round_up(N, 16))
    Np = _round_up(N, tm)

    xp = jnp.pad(x_nhwc, ((0, 0), (1, 1), (1, 1), (0, 0)))
    # patches ordered (ky, kx, cin) to match w_enc.reshape(9*Cin, Cout)
    patches = jnp.stack(
        [xp[:, ky:ky + H, kx:kx + W, :] for ky in range(3) for kx in range(3)],
        axis=3).reshape(N, K)                                       # (N, 9*Cin)
    if Np != N:
        patches = jnp.pad(patches, ((0, Np - N), (0, 0)))
    patches = patches.astype(jnp.bfloat16)                          # streamed in bf16
    # TODO(synk): fuse the im2col patch build into the kernel with a row-halo
    # BlockSpec so the 9x patch tensor never hits HBM.
    wmat = w_enc.reshape(K, Cout).astype(jnp.bfloat16)
    bmat = b_enc.reshape(1, Cout).astype(jnp.float32)

    out = pl.pallas_call(
        _enc_matmul_kernel,
        out_shape=jax.ShapeDtypeStruct((Np, Cout), jnp.float32),
        grid_spec=pltpu.PrefetchScalarGridSpec(
            num_scalar_prefetch=0,
            grid=(Np // tm,),
            in_specs=[
                pl.BlockSpec((tm, K), lambda i: (i, 0)),
                pl.BlockSpec((K, Cout), lambda i: (0, 0)),
                pl.BlockSpec((1, Cout), lambda i: (0, 0)),
            ],
            out_specs=pl.BlockSpec((tm, Cout), lambda i: (i, 0)),
        ),
        compiler_params=pltpu.CompilerParams(
            dimension_semantics=("parallel",),
            vmem_limit_bytes=32 * 1024 * 1024),
    )(patches, wmat, bmat)
    return out[:N].reshape(B, H, W, Cout)


def imnet_ensemble(mlp_in, areas, params, tn_max=1024):
    """imnet MLP on all 4 ensemble members, fused area-weighted sum + fat_tanh.

    mlp_in: (E, N, Din)  (cast to bf16)     areas: (E, N, 1) f32 (pre-flipped,
    pre-normalized).  Returns (N, OUT_CH) f32.
    """
    E, N, Din = mlp_in.shape
    Hd = params["w1"].shape[1]
    tn = min(tn_max, _round_up(N, 16))
    Np = _round_up(N, tn)
    if Np != N:
        mlp_in = jnp.pad(mlp_in, ((0, 0), (0, Np - N), (0, 0)))
        areas = jnp.pad(areas, ((0, 0), (0, Np - N), (0, 0)))

    # zero-pad the last layer to OUT_PAD lanes (padded channels produce 0)
    w3p = jnp.pad(params["w3"], ((0, 0), (0, OUT_PAD - OUT_CH))).astype(jnp.bfloat16)
    b3p = jnp.pad(params["b3"], (0, OUT_PAD - OUT_CH)).reshape(1, OUT_PAD).astype(jnp.float32)

    out = pl.pallas_call(
        _imnet_kernel,
        out_shape=jax.ShapeDtypeStruct((Np, OUT_PAD), jnp.float32),
        grid_spec=pltpu.PrefetchScalarGridSpec(
            num_scalar_prefetch=0,
            grid=(Np // tn,),
            in_specs=[
                pl.BlockSpec((E, tn, Din), lambda i: (0, i, 0)),
                pl.BlockSpec((E, tn, 1), lambda i: (0, i, 0)),
                pl.BlockSpec((Din, Hd), lambda i: (0, 0)),
                pl.BlockSpec((1, Hd), lambda i: (0, 0)),
                pl.BlockSpec((Hd, Hd), lambda i: (0, 0)),
                pl.BlockSpec((1, Hd), lambda i: (0, 0)),
                pl.BlockSpec((Hd, OUT_PAD), lambda i: (0, 0)),
                pl.BlockSpec((1, OUT_PAD), lambda i: (0, 0)),
            ],
            out_specs=pl.BlockSpec((tn, OUT_PAD), lambda i: (i, 0)),
        ),
        compiler_params=pltpu.CompilerParams(
            dimension_semantics=("parallel",),
            vmem_limit_bytes=32 * 1024 * 1024),
    )(mlp_in.astype(jnp.bfloat16),
      areas.astype(jnp.float32),
      params["w1"].astype(jnp.bfloat16),
      params["b1"].reshape(1, -1).astype(jnp.float32),
      params["w2"].astype(jnp.bfloat16),
      params["b2"].reshape(1, -1).astype(jnp.float32),
      w3p, b3p)
    return out[:N, :OUT_CH]


# =============================== LIIF forward =================================

@jax.jit
def liif_forward(inp_nchw, coord, cell, params):
    # layout: NCHW (PyTorch) -> NHWC (internal)
    x = jnp.transpose(inp_nchw, (0, 2, 3, 1)).astype(jnp.float32)
    B, H, W, _ = x.shape
    Q = coord.shape[1]
    coord = coord.astype(jnp.float32)
    cell = cell.astype(jnp.float32)

    # ---- gen_feat: encoder(inp).tanh()  (Pallas kernel) ----
    feat = encoder_conv_tanh(x, params["w_enc"], params["b_enc"])   # (B,H,W,C) f32
    C = feat.shape[-1]

    # ---- local ensemble coordinates ----
    offsets = jnp.array([[-1., -1.], [-1., 1.], [1., -1.], [1., 1.]],
                        dtype=jnp.float32)                          # (4,2)
    eps = 1e-6
    rad = jnp.array([1.0 / H, 1.0 / W], dtype=jnp.float32)          # 2/r/2
    rel_cell = cell * jnp.array([H, W], dtype=jnp.float32)          # (B,Q,2)

    ens = coord[None] + (offsets * rad[None])[:, None, None, :] + eps   # (4,B,Q,2)
    ens = jnp.clip(ens, -1.0 + 1e-10, 1.0 - 1e-10)

    # ---- grid_sample(mode='nearest', align_corners=False) as an index gather ----
    # unnormalize: ix = ((g + 1) * size - 1) / 2 ; nearest = round-half-to-even
    # TODO(synk): PyTorch zero-pads samples that round exactly onto the border
    # pixel index == size; here they are clamped to the edge pixel instead.
    iy = jnp.clip(jnp.round(((ens[..., 0] + 1.0) * H - 1.0) * 0.5), 0, H - 1).astype(jnp.int32)
    ix = jnp.clip(jnp.round(((ens[..., 1] + 1.0) * W - 1.0) * 0.5), 0, W - 1).astype(jnp.int32)

    # ---- feat_unfold fused with the gather: pull the 3x3 neighbourhood from the
    # compact zero-padded feature map instead of materializing (B,H,W,9C) ----
    fp = jnp.pad(feat.astype(jnp.bfloat16), ((0, 0), (1, 1), (1, 1), (0, 0)))
    b_idx = jnp.arange(B)[None, :, None]                            # (1,B,1)
    neigh = [fp[b_idx, iy + ky, ix + kx]                            # each (4,B,Q,C)
             for ky in range(3) for kx in range(3)]
    q_feat = jnp.stack(neigh, axis=-1).reshape(ENS, B, Q, C * 9)    # c*9+k ordering
    # TODO(synk): the gather itself is still plain-JAX; fully fusing it into the
    # imnet kernel (scalar-prefetched indices + in-VMEM neighbourhood build)
    # would remove the mlp_in HBM round trip.

    # feat_coord at the sampled pixel (make_coord values)
    q_coord0 = (2.0 * iy.astype(jnp.float32) + 1.0) / H - 1.0
    q_coord1 = (2.0 * ix.astype(jnp.float32) + 1.0) / W - 1.0
    rel0 = (coord[None, ..., 0] - q_coord0) * H
    rel1 = (coord[None, ..., 1] - q_coord1) * W
    rel_coord = jnp.stack([rel0, rel1], axis=-1)                    # (4,B,Q,2) f32

    mlp_in = jnp.concatenate(
        [q_feat,
         rel_coord.astype(jnp.bfloat16),
         jnp.broadcast_to(rel_cell[None], (ENS, B, Q, 2)).astype(jnp.bfloat16)],
        axis=-1)                                                    # (4,B,Q,9C+4) bf16

    # ---- ensemble areas (f32, flipped diagonally as in the reference) ----
    areas = jnp.abs(rel0 * rel1)                                    # (4,B,Q)
    areas = areas / jnp.maximum(jnp.sum(areas, axis=0, keepdims=True), 1e-5)
    areas = areas[::-1]                                             # [0,1,2,3] <- [3,2,1,0]

    N = B * Q
    Din = mlp_in.shape[-1]
    out = imnet_ensemble(mlp_in.reshape(ENS, N, Din),
                         areas.reshape(ENS, N, 1), params)          # (N, 3) Pallas kernel
    return out.reshape(B, Q, OUT_CH)


# ================================= parameters =================================

def init_params(key):
    ks = jax.random.split(key, 8)
    din = 9 * FEAT_CH + 4
    p = {
        "w_enc": jax.random.normal(ks[0], (3, 3, IN_CH, FEAT_CH), jnp.float32) * 0.2,
        "b_enc": jax.random.normal(ks[1], (FEAT_CH,), jnp.float32) * 0.05,
        "w1": jax.random.normal(ks[2], (din, HIDDEN), jnp.float32) * 0.1,
        "b1": jax.random.normal(ks[3], (HIDDEN,), jnp.float32) * 0.05,
        "w2": jax.random.normal(ks[4], (HIDDEN, HIDDEN), jnp.float32) * 0.1,
        "b2": jax.random.normal(ks[5], (HIDDEN,), jnp.float32) * 0.05,
        "w3": jax.random.normal(ks[6], (HIDDEN, OUT_CH), jnp.float32) * 0.1,
        "b3": jax.random.normal(ks[7], (OUT_CH,), jnp.float32) * 0.05,
    }
    return p


# ==================================== main ====================================

if __name__ == "__main__":
    key = jax.random.PRNGKey(0)
    kp, ki, kc, kl = jax.random.split(key, 4)

    B, H, W, Q = 2, 16, 16, 32
    params = init_params(kp)

    inp = jax.random.normal(ki, (B, IN_CH, H, W), jnp.float32)          # NCHW
    coord = jax.random.uniform(kc, (B, Q, 2), jnp.float32, -1.0, 1.0)   # query coords
    cell = jax.random.uniform(kl, (B, Q, 2), jnp.float32, 0.02, 0.1)    # query cell sizes

    out = liif_forward(inp, coord, cell, params)
    out = jax.block_until_ready(out)

    assert out.shape == (B, Q, OUT_CH), out.shape
    assert bool(jnp.all(jnp.isfinite(out)))
    print("KERNEL_OK")
</pallas_src>

<mosaic_0001>
module attributes {stable_mosaic.version = 11 : i64} {
  func.func @_enc_matmul_kernel(%arg0: i32, %arg1: memref<512x27xbf16, #tpu.memory_space<vmem>>, %arg2: memref<27x8xbf16, #tpu.memory_space<vmem>>, %arg3: memref<1x8xf32, #tpu.memory_space<vmem>>, %arg4: memref<512x8xf32, #tpu.memory_space<vmem>>) attributes {dimension_semantics = [#tpu.dimension_semantics<parallel>], iteration_bounds = array<i64: 1>, scalar_prefetch = 0 : i64, scratch_operands = 0 : i64, tpu.core_type = #tpu.core_type<tc>, window_params = [{transform_indices = @transform_0, window_bounds = array<i64: 512, 27>}, {pipeline_mode = #tpu.pipeline_mode<synchronous>, transform_indices = @transform_1, window_bounds = array<i64: 27, 8>}, {pipeline_mode = #tpu.pipeline_mode<synchronous>, transform_indices = @transform_2, window_bounds = array<i64: 1, 8>}, {transform_indices = @transform_3, window_bounds = array<i64: 512, 8>}]} {
    %c0 = arith.constant 0 : index
    %c0_0 = arith.constant 0 : index
    %0 = vector.load %arg1[%c0, %c0_0] : memref<512x27xbf16, #tpu.memory_space<vmem>>, vector<512x27xbf16>
    %c0_1 = arith.constant 0 : index
    %c0_2 = arith.constant 0 : index
    %1 = vector.load %arg2[%c0_1, %c0_2] : memref<27x8xbf16, #tpu.memory_space<vmem>>, vector<27x8xbf16>
    %cst = arith.constant dense<0.000000e+00> : vector<512x8xf32>
    %2 = tpu.matmul %0, %1, %cst {dimension_numbers = #tpu.dot_dimension_numbers<[1], [0], [0], [1], [0, 0, 1, 1], [], []>} : vector<512x27xbf16>, vector<27x8xbf16>, vector<512x8xf32> -> vector<512x8xf32>
    %c0_3 = arith.constant 0 : index
    %c0_4 = arith.constant 0 : index
    %3 = vector.load %arg3[%c0_3, %c0_4] : memref<1x8xf32, #tpu.memory_space<vmem>>, vector<1x8xf32>
    %4 = vector.broadcast %3 : vector<1x8xf32> to vector<512x8xf32>
    %5 = arith.addf %2, %4 : vector<512x8xf32>
    %6 = math.tanh %5 : vector<512x8xf32>
    %c0_5 = arith.constant 0 : index
    %c0_6 = arith.constant 0 : index
    %7 = vector.load %arg4[%c0_5, %c0_6] : memref<512x8xf32, #tpu.memory_space<vmem>>, vector<512x8xf32>
    tpu.vector_store %arg4[%c0_5, %c0_6], %6 {strides = array<i32>} : memref<512x8xf32, #tpu.memory_space<vmem>>, vector<512x8xf32>,
    return
  }
  func.func @transform_0(%arg0: i32) -> (i32, i32) {
    %c0_i32 = arith.constant 0 : i32
    %c0_i32_0 = arith.constant 0 : i32
    return %arg0, %c0_i32 : i32, i32
  }
  func.func @transform_1(%arg0: i32) -> (i32, i32) {
    %c0_i32 = arith.constant 0 : i32
    %c0_i32_0 = arith.constant 0 : i32
    %c0_i32_1 = arith.constant 0 : i32
    return %c0_i32, %c0_i32_0 : i32, i32
  }
  func.func @transform_2(%arg0: i32) -> (i32, i32) {
    %c0_i32 = arith.constant 0 : i32
    %c0_i32_0 = arith.constant 0 : i32
    %c0_i32_1 = arith.constant 0 : i32
    return %c0_i32, %c0_i32_0 : i32, i32
  }
  func.func @transform_3(%arg0: i32) -> (i32, i32) {
    %c0_i32 = arith.constant 0 : i32
    %c0_i32_0 = arith.constant 0 : i32
    return %arg0, %c0_i32 : i32, i32
  }
}

module attributes {stable_mosaic.version = 11 : i64} {
  func.func @_imnet_kernel(%arg0: i32, %arg1: memref<4x64x76xbf16, #tpu.memory_space<vmem>>, %arg2: memref<4x64x1xf32, #tpu.memory_space<vmem>>, %arg3: memref<76x32xbf16, #tpu.memory_space<vmem>>, %arg4: memref<1x32xf32, #tpu.memory_space<vmem>>, %arg5: memref<32x32xbf16, #tpu.memory_space<vmem>>, %arg6: memref<1x32xf32, #tpu.memory_space<vmem>>, %arg7: memref<32x8xbf16, #tpu.memory_space<vmem>>, %arg8: memref<1x8xf32, #tpu.memory_space<vmem>>, %arg9: memref<64x8xf32, #tpu.memory_space<vmem>>) attributes {dimension_semantics = [#tpu.dimension_semantics<parallel>], iteration_bounds = array<i64: 1>, scalar_prefetch = 0 : i64, scratch_operands = 0 : i64, tpu.core_type = #tpu.core_type<tc>, window_params = [{transform_indices = @transform_0, window_bounds = array<i64: 4, 64, 76>}, {transform_indices = @transform_1, window_bounds = array<i64: 4, 64, 1>}, {pipeline_mode = #tpu.pipeline_mode<synchronous>, transform_indices = @transform_2, window_bounds = array<i64: 76, 32>}, {pipeline_mode = #tpu.pipeline_mode<synchronous>, transform_indices = @transform_3, window_bounds = array<i64: 1, 32>}, {pipeline_mode = #tpu.pipeline_mode<synchronous>, transform_indices = @transform_4, window_bounds = array<i64: 32, 32>}, {pipeline_mode = #tpu.pipeline_mode<synchronous>, transform_indices = @transform_5, window_bounds = array<i64: 1, 32>}, {pipeline_mode = #tpu.pipeline_mode<synchronous>, transform_indices = @transform_6, window_bounds = array<i64: 32, 8>}, {pipeline_mode = #tpu.pipeline_mode<synchronous>, transform_indices = @transform_7, window_bounds = array<i64: 1, 8>}, {transform_indices = @transform_8, window_bounds = array<i64: 64, 8>}]} {
    %c0 = arith.constant 0 : index
    %c0_0 = arith.constant 0 : index
    %c0_1 = arith.constant 0 : index
    %0 = vector.load %arg1[%c0, %c0_0, %c0_1] : memref<4x64x76xbf16, #tpu.memory_space<vmem>>, vector<4x64x76xbf16>
    %1 = vector.shape_cast %0 : vector<4x64x76xbf16> to vector<256x76xbf16>
    %c0_2 = arith.constant 0 : index
    %c0_3 = arith.constant 0 : index
    %2 = vector.load %arg3[%c0_2, %c0_3] : memref<76x32xbf16, #tpu.memory_space<vmem>>, vector<76x32xbf16>
    %c0_4 = arith.constant 0 : index
    %c0_5 = arith.constant 0 : index
    %3 = vector.load %arg4[%c0_4, %c0_5] : memref<1x32xf32, #tpu.memory_space<vmem>>, vector<1x32xf32>
    %c0_6 = arith.constant 0 : index
    %c0_7 = arith.constant 0 : index
    %4 = vector.load %arg5[%c0_6, %c0_7] : memref<32x32xbf16, #tpu.memory_space<vmem>>, vector<32x32xbf16>
    %c0_8 = arith.constant 0 : index
    %c0_9 = arith.constant 0 : index
    %5 = vector.load %arg6[%c0_8, %c0_9] : memref<1x32xf32, #tpu.memory_space<vmem>>, vector<1x32xf32>
    %c0_10 = arith.constant 0 : index
    %c0_11 = arith.constant 0 : index
    %6 = vector.load %arg7[%c0_10, %c0_11] : memref<32x8xbf16, #tpu.memory_space<vmem>>, vector<32x8xbf16>
    %c0_12 = arith.constant 0 : index
    %c0_13 = arith.constant 0 : index
    %7 = vector.load %arg8[%c0_12, %c0_13] : memref<1x8xf32, #tpu.memory_space<vmem>>, vector<1x8xf32>
    %cst = arith.constant dense<0.000000e+00> : vector<256x32xf32>
    %8 = tpu.matmul %1, %2, %cst {dimension_numbers = #tpu.dot_dimension_numbers<[1], [0], [0], [1], [0, 0, 1, 1], [], []>} : vector<256x76xbf16>, vector<76x32xbf16>, vector<256x32xf32> -> vector<256x32xf32>
    %9 = vector.broadcast %3 : vector<1x32xf32> to vector<256x32xf32>
    %10 = arith.addf %8, %9 : vector<256x32xf32>
    %cst_14 = arith.constant 0.000000e+00 : f32
    %11 = vector.broadcast %cst_14 : f32 to vector<256x32xf32>
    %12 = arith.maximumf %10, %11 : vector<256x32xf32>
    %13 = arith.truncf %12 : vector<256x32xf32> to vector<256x32xbf16>
    %cst_15 = arith.constant dense<0.000000e+00> : vector<256x32xf32>
    %14 = tpu.matmul %13, %4, %cst_15 {dimension_numbers = #tpu.dot_dimension_numbers<[1], [0], [0], [1], [0, 0, 1, 1], [], []>} : vector<256x32xbf16>, vector<32x32xbf16>, vector<256x32xf32> -> vector<256x32xf32>
    %15 = vector.broadcast %5 : vector<1x32xf32> to vector<256x32xf32>
    %16 = arith.addf %14, %15 : vector<256x32xf32>
    %cst_16 = arith.constant 0.000000e+00 : f32
    %17 = vector.broadcast %cst_16 : f32 to vector<256x32xf32>
    %18 = arith.maximumf %16, %17 : vector<256x32xf32>
    %19 = arith.truncf %18 : vector<256x32xf32> to vector<256x32xbf16>
    %cst_17 = arith.constant dense<0.000000e+00> : vector<256x8xf32>
    %20 = tpu.matmul %19, %6, %cst_17 {dimension_numbers = #tpu.dot_dimension_numbers<[1], [0], [0], [1], [0, 0, 1, 1], [], []>} : vector<256x32xbf16>, vector<32x8xbf16>, vector<256x8xf32> -> vector<256x8xf32>
    %21 = vector.broadcast %7 : vector<1x8xf32> to vector<256x8xf32>
    %22 = arith.addf %20, %21 : vector<256x8xf32>
    %23 = vector.shape_cast %22 : vector<256x8xf32> to vector<4x64x8xf32>
    %c0_18 = arith.constant 0 : index
    %c0_19 = arith.constant 0 : index
    %c0_20 = arith.constant 0 : index
    %24 = vector.load %arg2[%c0_18, %c0_19, %c0_20] : memref<4x64x1xf32, #tpu.memory_space<vmem>>, vector<4x64x1xf32>
    %25 = vector.broadcast %24 : vector<4x64x1xf32> to vector<4x64x8xf32>
    %26 = arith.mulf %23, %25 : vector<4x64x8xf32>
    %cst_21 = arith.constant dense<0.000000e+00> : vector<64x8xf32>
    %27 = vector.multi_reduction <add>, %26, %cst_21 [0] : vector<4x64x8xf32> to vector<64x8xf32>
    %28 = math.tanh %27 : vector<64x8xf32>
    %cst_22 = arith.constant 1.010000e+00 : f32
    %29 = vector.broadcast %cst_22 : f32 to vector<64x8xf32>
    %30 = arith.mulf %28, %29 : vector<64x8xf32>
    %c0_23 = arith.constant 0 : index
    %c0_24 = arith.constant 0 : index
    %31 = vector.load %arg9[%c0_23, %c0_24] : memref<64x8xf32, #tpu.memory_space<vmem>>, vector<64x8xf32>
    tpu.vector_store %arg9[%c0_23, %c0_24], %30 {strides = array<i32>} : memref<64x8xf32, #tpu.memory_space<vmem>>, vector<64x8xf32>,
    return
  }
  func.func @transform_0(%arg0: i32) -> (i32, i32, i32) {
    %c0_i32 = arith.constant 0 : i32
    %c0_i32_0 = arith.constant 0 : i32
    %c0_i32_1 = arith.constant 0 : i32
    return %c0_i32, %arg0, %c0_i32_0 : i32, i32, i32
  }
  func.func @transform_1(%arg0: i32) -> (i32, i32, i32) {
    %c0_i32 = arith.constant 0 : i32
    %c0_i32_0 = arith.constant 0 : i32
    %c0_i32_1 = arith.constant 0 : i32
    return %c0_i32, %arg0, %c0_i32_0 : i32, i32, i32
  }
  func.func @transform_2(%arg0: i32) -> (i32, i32) {
    %c0_i32 = arith.constant 0 : i32
    %c0_i32_0 = arith.constant 0 : i32
    %c0_i32_1 = arith.constant 0 : i32
    return %c0_i32, %c0_i32_0 : i32, i32
  }
  func.func @transform_3(%arg0: i32) -> (i32, i32) {
    %c0_i32 = arith.constant 0 : i32
    %c0_i32_0 = arith.constant 0 : i32
    %c0_i32_1 = arith.constant 0 : i32
    return %c0_i32, %c0_i32_0 : i32, i32
  }
  func.func @transform_4(%arg0: i32) -> (i32, i32) {
    %c0_i32 = arith.constant 0 : i32
    %c0_i32_0 = arith.constant 0 : i32
    %c0_i32_1 = arith.constant 0 : i32
    return %c0_i32, %c0_i32_0 : i32, i32
  }
  func.func @transform_5(%arg0: i32) -> (i32, i32) {
    %c0_i32 = arith.constant 0 : i32
    %c0_i32_0 = arith.constant 0 : i32
    %c0_i32_1 = arith.constant 0 : i32
    return %c0_i32, %c0_i32_0 : i32, i32
  }
  func.func @transform_6(%arg0: i32) -> (i32, i32) {
    %c0_i32 = arith.constant 0 : i32
    %c0_i32_0 = arith.constant 0 : i32
    %c0_i32_1 = arith.constant 0 : i32
    return %c0_i32, %c0_i32_0 : i32, i32
  }
  func.func @transform_7(%arg0: i32) -> (i32, i32) {
    %c0_i32 = arith.constant 0 : i32
    %c0_i32_0 = arith.constant 0 : i32
    %c0_i32_1 = arith.constant 0 : i32
    return %c0_i32, %c0_i32_0 : i32, i32
  }
  func.func @transform_8(%arg0: i32) -> (i32, i32) {
    %c0_i32 = arith.constant 0 : i32
    %c0_i32_0 = arith.constant 0 : i32
    return %arg0, %c0_i32 : i32, i32
  }
}

</mosaic_0001>

<llo_original>
// kernel: liif_forward.2
$region0: #{liif_forward.2}
  #allocation0 [shape = 'u32[]', space=smem, size = 0x4, offset = 0x4, fixed_abs, tag = 'smem constant byte address 0x4 - core index']
  #allocation1 [shape = 'u32[144,128]{1,0:T(1,128)}', space=vmem, size = 0x12000, scoped, tag = 'internal scratch']
  %s0 = inlined_call_operand.vmem [shape: bf16[512,27], index: 0, kind: input, shape index: {}]
  %s1 = inlined_call_operand.vmem [shape: bf16[27,8], index: 1, kind: input, shape index: {}]
  %s2 = inlined_call_operand.vmem [shape: f32[1,8], index: 2, kind: input, shape index: {}]
  %s3 = inlined_call_operand.vmem [shape: f32[512,8], index: 3, kind: output, shape index: {}]
  %s4 = sld [smem:[#allocation0]]
  $region22: #{liif_forward.2} parent=0
    _
  %s6 = ssub.s32 1, %s4
  %s7 = scalar_select 0, %s6, %s4
  // Predicated region
  $region2: #{liif_forward.2} parent=0 // pred_check
    _
  $region3: #{liif_forward.2} parent=0 // pred_check_branch
    %9 = sbr.rel (0) target = $region5
  $region4: #{liif_forward.2} parent=0 // pred_region
    _
  $region5: #{liif_forward.2} parent=0 // pred_fallthru
    _
  // Predicated region
  $region6: #{liif_forward.2} parent=0 // pred_check
    _
  $region7: #{liif_forward.2} parent=0 // pred_check_branch
    %11 = sbr.rel (0) target = $region9
  $region8: #{liif_forward.2} parent=0 // pred_region
    _
  $region9: #{liif_forward.2} parent=0 // pred_fallthru
    _
  // Predicated region
  $region10: #{liif_forward.2} parent=0 // pred_check
    _
  $region11: #{liif_forward.2} parent=0 // pred_check_branch
    %13 = sbr.rel (0) target = $region13
  $region12: #{liif_forward.2} parent=0 // pred_region
    _
  $region13: #{liif_forward.2} parent=0 // pred_fallthru
    _
  %v15 = vld [vmem:[%s0] sm:$0xf]
  %v16 = vld [vmem:[%s0 + $0x4] sm:$0xf]
  %v17 = vld [vmem:[%s0 + $0x8] sm:$0xf]
  %v18 = vld [vmem:[%s0 + $0xc] sm:$0xf]
  %v19 = vld [vmem:[%s0 + $0x10] sm:$0xf]
  %v20 = vld [vmem:[%s0 + $0x14] sm:$0xf]
  %v21 = vld [vmem:[%s0 + $0x18] sm:$0xf]
  %v22 = vld [vmem:[%s0 + $0x1c] sm:$0xf]
  %v23 = vld [vmem:[%s0 + $0x20] sm:$0xf]
  %v24 = vld [vmem:[%s0 + $0x24] sm:$0xf]
  %v25 = vld [vmem:[%s0 + $0x28] sm:$0xf]
  %v26 = vld [vmem:[%s0 + $0x2c] sm:$0xf]
  %v27 = vld [vmem:[%s0 + $0x30] sm:$0xf]
  %v28 = vld [vmem:[%s0 + $0x34] sm:$0xf]
  %v29 = vld [vmem:[%s0 + $0x38] sm:$0xf]
  %v30 = vld [vmem:[%s0 + $0x3c] sm:$0xf]
  %v31 = vld [vmem:[%s0 + $0x40] sm:$0xf]
  %v32 = vld [vmem:[%s0 + $0x44] sm:$0xf]
  %v33 = vld [vmem:[%s0 + $0x48] sm:$0xf]
  %v34 = vld [vmem:[%s0 + $0x4c] sm:$0xf]
  %v35 = vld [vmem:[%s0 + $0x50] sm:$0xf]
  %v36 = vld [vmem:[%s0 + $0x54] sm:$0xf]
  %v37 = vld [vmem:[%s0 + $0x58] sm:$0xf]
  %v38 = vld [vmem:[%s0 + $0x5c] sm:$0xf]
  %v39 = vld [vmem:[%s0 + $0x60] sm:$0xf]
  %v40 = vld [vmem:[%s0 + $0x64] sm:$0xf]
  %v41 = vld [vmem:[%s0 + $0x68] sm:$0xf]
  %v42 = vld [vmem:[%s0 + $0x6c] sm:$0xf]
  %v43 = vld [vmem:[%s0 + $0x70] sm:$0xf]
  %v44 = vld [vmem:[%s0 + $0x74] sm:$0xf]
  %v45 = vld [vmem:[%s0 + $0x78] sm:$0xf]
  %v46 = vld [vmem:[%s0 + $0x7c] sm:$0xf]
  %v47 = vld [vmem:[%s0 + $0x80] sm:$0xf]
  %v48 = vld [vmem:[%s0 + $0x84] sm:$0xf]
  %v49 = vld [vmem:[%s0 + $0x88] sm:$0xf]
  %v50 = vld [vmem:[%s0 + $0x8c] sm:$0xf]
  %v51 = vld [vmem:[%s0 + $0x90] sm:$0xf]
  %v52 = vld [vmem:[%s0 + $0x94] sm:$0xf]
  %v53 = vld [vmem:[%s0 + $0x98] sm:$0xf]
  %v54 = vld [vmem:[%s0 + $0x9c] sm:$0xf]
  %v55 = vld [vmem:[%s0 + $0xa0] sm:$0xf]
  %v56 = vld [vmem:[%s0 + $0xa4] sm:$0xf]
  %v57 = vld [vmem:[%s0 + $0xa8] sm:$0xf]
  %v58 = vld [vmem:[%s0 + $0xac] sm:$0xf]
  %v59 = vld [vmem:[%s0 + $0xb0] sm:$0xf]
  %v60 = vld [vmem:[%s0 + $0xb4] sm:$0xf]
  %v61 = vld [vmem:[%s0 + $0xb8] sm:$0xf]
  %v62 = vld [vmem:[%s0 + $0xbc] sm:$0xf]
  %v63 = vld [vmem:[%s0 + $0xc0] sm:$0xf]
  %v64 = vld [vmem:[%s0 + $0xc4] sm:$0xf]
  %v65 = vld [vmem:[%s0 + $0xc8] sm:$0xf]
  %v66 = vld [vmem:[%s0 + $0xcc] sm:$0xf]
  %v67 = vld [vmem:[%s0 + $0xd0] sm:$0xf]
  %v68 = vld [vmem:[%s0 + $0xd4] sm:$0xf]
  %v69 = vld [vmem:[%s0 + $0xd8] sm:$0xf]
  %v70 = vld [vmem:[%s0 + $0xdc] sm:$0xf]
  %v71 = vld [vmem:[%s0 + $0xe0] sm:$0xf]
  %v72 = vld [vmem:[%s0 + $0xe4] sm:$0xf]
  %v73 = vld [vmem:[%s0 + $0xe8] sm:$0xf]
  %v74 = vld [vmem:[%s0 + $0xec] sm:$0xf]
  %v75 = vld [vmem:[%s0 + $0xf0] sm:$0xf]
  %v76 = vld [vmem:[%s0 + $0xf4] sm:$0xf]
  %v77 = vld [vmem:[%s0 + $0xf8] sm:$0xf]
  %v78 = vld [vmem:[%s0 + $0xfc] sm:$0xf]
  %v79 = vld [vmem:[%s1] sm:$0xf]
  %v80 = vld [vmem:[%s1 + $0x4] sm:$0xf]
  %v81 = vld [vmem:[%s1 + $0x8] sm:$0xf]
  %v82 = vld [vmem:[%s1 + $0xc] sm:$0x3]
  %v83 = vld [vmem:[%s2] sm:$0x1]
  %v85 = vlaneseq
  %v86 = vshrl.u32 %v85, 7
  %v87 = vsub.s32 0, %v86
  %v88 = vrot.slane %v83, %v87
  %v154 = vunpack.c.l.b16 %v15
  %v155 = vunpack.c.l.b16 %v16
  %v156 = vunpack.c.l.b16 %v17
  %v157 = vunpack.c.l.b16 %v18
  %v158 = vunpack.c.l.b16 %v19
  %v159 = vunpack.c.l.b16 %v20
  %v160 = vunpack.c.l.b16 %v21
  %v161 = vunpack.c.l.b16 %v22
  %v162 = vunpack.c.l.b16 %v23
  %v163 = vunpack.c.l.b16 %v24
  %v164 = vunpack.c.l.b16 %v25
  %v165 = vunpack.c.l.b16 %v26
  %v166 = vunpack.c.l.b16 %v27
  %v167 = vunpack.c.l.b16 %v28
  %v168 = vunpack.c.l.b16 %v29
  %v169 = vunpack.c.l.b16 %v30
  %v170 = vunpack.c.l.b16 %v31
  %v171 = vunpack.c.l.b16 %v32
  %v172 = vunpack.c.l.b16 %v33
  %v173 = vunpack.c.l.b16 %v34
  %v174 = vunpack.c.l.b16 %v35
  %v175 = vunpack.c.l.b16 %v36
  %v176 = vunpack.c.l.b16 %v37
  %v177 = vunpack.c.l.b16 %v38
  %v178 = vunpack.c.l.b16 %v39
  %v179 = vunpack.c.l.b16 %v40
  %v180 = vunpack.c.l.b16 %v41
  %v181 = vunpack.c.l.b16 %v42
  %v182 = vunpack.c.l.b16 %v43
  %v183 = vunpack.c.l.b16 %v44
  %v184 = vunpack.c.l.b16 %v45
  %v185 = vunpack.c.l.b16 %v46
  %v186 = vunpack.c.l.b16 %v47
  %v187 = vunpack.c.l.b16 %v48
  %v188 = vunpack.c.l.b16 %v49
  %v189 = vunpack.c.l.b16 %v50
  %v190 = vunpack.c.l.b16 %v51
  %v191 = vunpack.c.l.b16 %v52
  %v192 = vunpack.c.l.b16 %v53
  %v193 = vunpack.c.l.b16 %v54
  %v194 = vunpack.c.l.b16 %v55
  %v195 = vunpack.c.l.b16 %v56
  %v196 = vunpack.c.l.b16 %v57
  %v197 = vunpack.c.l.b16 %v58
  %v198 = vunpack.c.l.b16 %v59
  %v199 = vunpack.c.l.b16 %v60
  %v200 = vunpack.c.l.b16 %v61
  %v201 = vunpack.c.l.b16 %v62
  %v202 = vunpack.c.l.b16 %v63
  %v203 = vunpack.c.l.b16 %v64
  %v204 = vunpack.c.l.b16 %v65
  %v205 = vunpack.c.l.b16 %v66
  %v206 = vunpack.c.l.b16 %v67
  %v207 = vunpack.c.l.b16 %v68
  %v208 = vunpack.c.l.b16 %v69
  %v209 = vunpack.c.l.b16 %v70
  %v210 = vunpack.c.l.b16 %v71
  %v211 = vunpack.c.l.b16 %v72
  %v212 = vunpack.c.l.b16 %v73
  %v213 = vunpack.c.l.b16 %v74
  %v214 = vunpack.c.l.b16 %v75
  %v215 = vunpack.c.l.b16 %v76
  %v216 = vunpack.c.l.b16 %v77
  %v217 = vunpack.c.l.b16 %v78
  %v218 = vpack.c.b16 %v155, %v154
  %v219 = vpack.c.b16 %v157, %v156
  %v220 = vpack.c.b16 %v159, %v158
  %v221 = vpack.c.b16 %v161, %v160
  %v222 = vpack.c.b16 %v163, %v162
  %v223 = vpack.c.b16 %v165, %v164
  %v224 = vpack.c.b16 %v167, %v166
  %v225 = vpack.c.b16 %v169, %v168
  %v226 = vpack.c.b16 %v171, %v170
  %v227 = vpack.c.b16 %v173, %v172
  %v228 = vpack.c.b16 %v175, %v174
  %v229 = vpack.c.b16 %v177, %v176
  %v230 = vpack.c.b16 %v179, %v178
  %v231 = vpack.c.b16 %v181, %v180
  %v232 = vpack.c.b16 %v183, %v182
  %v233 = vpack.c.b16 %v185, %v184
  %v234 = vpack.c.b16 %v187, %v186
  %v235 = vpack.c.b16 %v189, %v188
  %v236 = vpack.c.b16 %v191, %v190
  %v237 = vpack.c.b16 %v193, %v192
  %v238 = vpack.c.b16 %v195, %v194
  %v239 = vpack.c.b16 %v197, %v196
  %v240 = vpack.c.b16 %v199, %v198
  %v241 = vpack.c.b16 %v201, %v200
  %v242 = vpack.c.b16 %v203, %v202
  %v243 = vpack.c.b16 %v205, %v204
  %v244 = vpack.c.b16 %v207, %v206
  %v245 = vpack.c.b16 %v209, %v208
  %v246 = vpack.c.b16 %v211, %v210
  %v247 = vpack.c.b16 %v213, %v212
  %v248 = vpack.c.b16 %v215, %v214
  %v249 = vpack.c.b16 %v217, %v216
  %v254 = vunpack.c.l.b16 %v79
  %v255 = vunpack.c.l.b16 %v80
  %v256 = vunpack.c.l.b16 %v81
  %v257 = vunpack.c.l.b16 %v82
  %v258 = vpack.c.b16 %v255, %v254
  %v259 = vpack.c.b16 %v257, %v256
  %vm261 = vcmask 220160
  %v263 = vsel %vm261, %v218, 0
  %v266 = vsel %vm261, %v219, 0
  %v269 = vsel %vm261, %v220, 0
  %v272 = vsel %vm261, %v221, 0
  %v275 = vsel %vm261, %v222, 0
  %v278 = vsel %vm261, %v223, 0
  %v281 = vsel %vm261, %v224, 0
  %v284 = vsel %vm261, %v225, 0
  %v287 = vsel %vm261, %v226, 0
  %v290 = vsel %vm261, %v227, 0
  %v293 = vsel %vm261, %v228, 0
  %v296 = vsel %vm261, %v229, 0
  %v299 = vsel %vm261, %v230, 0
  %v302 = vsel %vm261, %v231, 0
  %v305 = vsel %vm261, %v232, 0
  %v308 = vsel %vm261, %v233, 0
  %v311 = vsel %vm261, %v234, 0
  %v314 = vsel %vm261, %v235, 0
  %v317 = vsel %vm261, %v236, 0
  %v320 = vsel %vm261, %v237, 0
  %v323 = vsel %vm261, %v238, 0
  %v326 = vsel %vm261, %v239, 0
  %v329 = vsel %vm261, %v240, 0
  %v332 = vsel %vm261, %v241, 0
  %v335 = vsel %vm261, %v242, 0
  %v338 = vsel %vm261, %v243, 0
  %v341 = vsel %vm261, %v244, 0
  %v344 = vsel %vm261, %v245, 0
  %v347 = vsel %vm261, %v246, 0
  %v350 = vsel %vm261, %v247, 0
  %v353 = vsel %vm261, %v248, 0
  %v356 = vsel %vm261, %v249, 0
  %vm358 = vcmask 1044480
  %vm359 = vcmask 1045504
  %v360 = vsel %vm358, 4294967295, 65535
  %v361 = vsel %vm359, %v360, 0
  %v363 = vand.u32 %v259, %v361
  %365 = vmatprep.subr.bf16.mxu0 0
  %366 = vmatpush1.bf16.msra.mxu0 0
  %367 = vmatprep.subr.bf16.mxu0 0
  %368 = vmatpush1.bf16.msra.mxu0 0
  %369 = vmatprep.subr.bf16.mxu0 0
  %370 = vmatpush1.bf16.msra.mxu0 0
  %371 = vmatprep.subr.bf16.mxu0 0
  %372 = vmatpush1.bf16.msra.mxu0 0
  %373 = vmatprep.subr.bf16.mxu0 0
  %374 = vmatpush1.bf16.msra.mxu0 0
  %375 = vmatprep.subr.bf16.mxu0 0
  %376 = vmatpush1.bf16.msra.mxu0 0
  %377 = vmatprep.subr.bf16.mxu0 0
  %378 = vmatpush1.bf16.msra.mxu0 %v363
  %379 = vmatprep.subr.bf16.mxu0 0
  %380 = vmatpush1.bf16.msra.mxu0 %v258
  %381 = vmatprep.subr.bf16.mxu0 0
  %382 = vmatpush2.bf16.msra.mxu0 0
  %383 = vmatprep.subr.bf16.mxu0 0
  %384 = vmatpush2.bf16.msra.mxu0 0
  %385 = vmatprep.subr.bf16.mxu0 0
  %386 = vmatpush2.bf16.msra.mxu0 0
  %387 = vmatprep.subr.bf16.mxu0 0
  %388 = vmatpush2.bf16.msra.mxu0 0
  %389 = vmatprep.subr.bf16.mxu0 0
  %390 = vmatpush2.bf16.msra.mxu0 0
  %391 = vmatprep.subr.bf16.mxu0 0
  %392 = vmatpush2.bf16.msra.mxu0 0
  %393 = vmatprep.subr.bf16.mxu0 0
  %394 = vmatpush2.bf16.msra.mxu0 0
  %395 = vmatprep.subr.bf16.mxu0 0
  %396 = vmatpush2.bf16.msra.mxu0 0
  %397 = vmatprep.mubr.bf16.mxu0 0
  %398 = vmatmul.mubr.bf16.gmra.mxu0 %v263
  %v399 = vpop.f32.mrf.mxu0
  %v400 = vadd.f32 %v88, %v399
  %v401 = vpop.f32.mrf.mxu0
  %v402 = vpop.f32.mrf.mxu0
  %v403 = vadd.f32 %v88, %v402
  %v404 = vpop.f32.mrf.mxu0
  %405 = vmatprep.mubr.bf16.mxu0 0
  %406 = vmatmul.mubr.bf16.gmra.mxu0 %v266
  %v407 = vpop.f32.mrf.mxu0
  %v408 = vadd.f32 %v88, %v407
  %v409 = vpop.f32.mrf.mxu0
  %v410 = vpop.f32.mrf.mxu0
  %v411 = vadd.f32 %v88, %v410
  %v412 = vpop.f32.mrf.mxu0
  %413 = vmatprep.mubr.bf16.mxu0 0
  %414 = vmatmul.mubr.bf16.gmra.mxu0 %v269
  %v415 = vpop.f32.mrf.mxu0
  %v416 = vadd.f32 %v88, %v415
  %v417 = vpop.f32.mrf.mxu0
  %v418 = vpop.f32.mrf.mxu0
  %v419 = vadd.f32 %v88, %v418
  %v420 = vpop.f32.mrf.mxu0
  %421 = vmatprep.mubr.bf16.mxu0 0
  %422 = vmatmul.mubr.bf16.gmra.mxu0 %v272
  %v423 = vpop.f32.mrf.mxu0
  %v424 = vadd.f32 %v88, %v423
  %v425 = vpop.f32.mrf.mxu0
  %v426 = vpop.f32.mrf.mxu0
  %v427 = vadd.f32 %v88, %v426
  %v428 = vpop.f32.mrf.mxu0
  %429 = vmatprep.mubr.bf16.mxu0 0
  %430 = vmatmul.mubr.bf16.gmra.mxu0 %v275
  %v431 = vpop.f32.mrf.mxu0
  %v432 = vadd.f32 %v88, %v431
  %v433 = vpop.f32.mrf.mxu0
  %v434 = vpop.f32.mrf.mxu0
  %v435 = vadd.f32 %v88, %v434
  %v436 = vpop.f32.mrf.mxu0
  %437 = vmatprep.mubr.bf16.mxu0 0
  %438 = vmatmul.mubr.bf16.gmra.mxu0 %v278
  %v439 = vpop.f32.mrf.mxu0
  %v440 = vadd.f32 %v88, %v439
  %v441 = vpop.f32.mrf.mxu0
  %v442 = vpop.f32.mrf.mxu0
  %v443 = vadd.f32 %v88, %v442
  %v444 = vpop.f32.mrf.mxu0
  %445 = vmatprep.mubr.bf16.mxu0 0
  %446 = vmatmul.mubr.bf16.gmra.mxu0 %v281
  %v447 = vpop.f32.mrf.mxu0
  %v448 = vadd.f32 %v88, %v447
  %v449 = vpop.f32.mrf.mxu0
  %v450 = vpop.f32.mrf.mxu0
  %v451 = vadd.f32 %v88, %v450
  %v452 = vpop.f32.mrf.mxu0
  %453 = vmatprep.mubr.bf16.mxu0 0
  %454 = vmatmul.mubr.bf16.gmra.mxu0 %v284
  %v455 = vpop.f32.mrf.mxu0
  %v456 = vadd.f32 %v88, %v455
  %v457 = vpop.f32.mrf.mxu0
  %v458 = vpop.f32.mrf.mxu0
  %v459 = vadd.f32 %v88, %v458
  %v460 = vpop.f32.mrf.mxu0
  %461 = vmatprep.mubr.bf16.mxu0 0
  %462 = vmatmul.mubr.bf16.gmra.mxu0 %v287
  %v463 = vpop.f32.mrf.mxu0
  %v464 = vadd.f32 %v88, %v463
  %v465 = vpop.f32.mrf.mxu0
  %v466 = vpop.f32.mrf.mxu0
  %v467 = vadd.f32 %v88, %v466
  %v468 = vpop.f32.mrf.mxu0
  %469 = vmatprep.mubr.bf16.mxu0 0
  %470 = vmatmul.mubr.bf16.gmra.mxu0 %v290
  %v471 = vpop.f32.mrf.mxu0
  %v472 = vadd.f32 %v88, %v471
  %v473 = vpop.f32.mrf.mxu0
  %v474 = vpop.f32.mrf.mxu0
  %v475 = vadd.f32 %v88, %v474
  %v476 = vpop.f32.mrf.mxu0
  %477 = vmatprep.mubr.bf16.mxu0 0
  %478 = vmatmul.mubr.bf16.gmra.mxu0 %v293
  %v479 = vpop.f32.mrf.mxu0
  %v480 = vadd.f32 %v88, %v479
  %v481 = vpop.f32.mrf.mxu0
  %v482 = vpop.f32.mrf.mxu0
  %v483 = vadd.f32 %v88, %v482
  %v484 = vpop.f32.mrf.mxu0
  %485 = vmatprep.mubr.bf16.mxu0 0
  %486 = vmatmul.mubr.bf16.gmra.mxu0 %v296
  %v487 = vpop.f32.mrf.mxu0
  %v488 = vadd.f32 %v88, %v487
  %v489 = vpop.f32.mrf.mxu0
  %v490 = vpop.f32.mrf.mxu0
  %v491 = vadd.f32 %v88, %v490
  %v492 = vpop.f32.mrf.mxu0
  %493 = vmatprep.mubr.bf16.mxu0 0
  %494 = vmatmul.mubr.bf16.gmra.mxu0 %v299
  %v495 = vpop.f32.mrf.mxu0
  %v496 = vadd.f32 %v88, %v495
  %v497 = vpop.f32.mrf.mxu0
  %v498 = vpop.f32.mrf.mxu0
  %v499 = vadd.f32 %v88, %v498
  %v500 = vpop.f32.mrf.mxu0
  %501 = vmatprep.mubr.bf16.mxu0 0
  %502 = vmatmul.mubr.bf16.gmra.mxu0 %v302
  %v503 = vpop.f32.mrf.mxu0
  %v504 = vadd.f32 %v88, %v503
  %v505 = vpop.f32.mrf.mxu0
  %v506 = vpop.f32.mrf.mxu0
  %v507 = vadd.f32 %v88, %v506
  %v508 = vpop.f32.mrf.mxu0
  %509 = vmatprep.mubr.bf16.mxu0 0
  %510 = vmatmul.mubr.bf16.gmra.mxu0 %v305
  %v511 = vpop.f32.mrf.mxu0
  %v512 = vadd.f32 %v88, %v511
  %v513 = vpop.f32.mrf.mxu0
  %v514 = vpop.f32.mrf.mxu0
  %v515 = vadd.f32 %v88, %v514
  %v516 = vpop.f32.mrf.mxu0
  %517 = vmatprep.mubr.bf16.mxu0 0
  %518 = vmatmul.mubr.bf16.gmra.mxu0 %v308
  %v519 = vpop.f32.mrf.mxu0
  %v520 = vadd.f32 %v88, %v519
  %v521 = vpop.f32.mrf.mxu0
  %v522 = vpop.f32.mrf.mxu0
  %v523 = vadd.f32 %v88, %v522
  %v524 = vpop.f32.mrf.mxu0
  %525 = vmatprep.mubr.bf16.mxu0 0
  %526 = vmatmul.mubr.bf16.gmra.mxu0 %v311
  %v527 = vpop.f32.mrf.mxu0
  %v528 = vadd.f32 %v88, %v527
  %v529 = vpop.f32.mrf.mxu0
  %v530 = vpop.f32.mrf.mxu0
  %v531 = vadd.f32 %v88, %v530
  %v532 = vpop.f32.mrf.mxu0
  %533 = vmatprep.mubr.bf16.mxu0 0
  %534 = vmatmul.mubr.bf16.gmra.mxu0 %v314
  %v535 = vpop.f32.mrf.mxu0
  %v536 = vadd.f32 %v88, %v535
  %v537 = vpop.f32.mrf.mxu0
  %v538 = vpop.f32.mrf.mxu0
  %v539 = vadd.f32 %v88, %v538
  %v540 = vpop.f32.mrf.mxu0
  %541 = vmatprep.mubr.bf16.mxu0 0
  %542 = vmatmul.mubr.bf16.gmra.mxu0 %v317
  %v543 = vpop.f32.mrf.mxu0
  %v544 = vadd.f32 %v88, %v543
  %v545 = vpop.f32.mrf.mxu0
  %v546 = vpop.f32.mrf.mxu0
  %v547 = vadd.f32 %v88, %v546
  %v548 = vpop.f32.mrf.mxu0
  %549 = vmatprep.mubr.bf16.mxu0 0
  %550 = vmatmul.mubr.bf16.gmra.mxu0 %v320
  %v551 = vpop.f32.mrf.mxu0
  %v552 = vadd.f32 %v88, %v551
  %v553 = vpop.f32.mrf.mxu0
  %v554 = vpop.f32.mrf.mxu0
  %v555 = vadd.f32 %v88, %v554
  %v556 = vpop.f32.mrf.mxu0
  %557 = vmatprep.mubr.bf16.mxu0 0
  %558 = vmatmul.mubr.bf16.gmra.mxu0 %v323
  %v559 = vpop.f32.mrf.mxu0
  %v560 = vadd.f32 %v88, %v559
  %v561 = vpop.f32.mrf.mxu0
  %v562 = vpop.f32.mrf.mxu0
  %v563 = vadd.f32 %v88, %v562
  %v564 = vpop.f32.mrf.mxu0
  %565 = vmatprep.mubr.bf16.mxu0 0
  %566 = vmatmul.mubr.bf16.gmra.mxu0 %v326
  %v567 = vpop.f32.mrf.mxu0
  %v568 = vadd.f32 %v88, %v567
  %v569 = vpop.f32.mrf.mxu0
  %v570 = vpop.f32.mrf.mxu0
  %v571 = vadd.f32 %v88, %v570
  %v572 = vpop.f32.mrf.mxu0
  %573 = vmatprep.mubr.bf16.mxu0 0
  %574 = vmatmul.mubr.bf16.gmra.mxu0 %v329
  %v575 = vpop.f32.mrf.mxu0
  %v576 = vadd.f32 %v88, %v575
  %v577 = vpop.f32.mrf.mxu0
  %v578 = vpop.f32.mrf.mxu0
  %v579 = vadd.f32 %v88, %v578
  %v580 = vpop.f32.mrf.mxu0
  %581 = vmatprep.mubr.bf16.mxu0 0
  %582 = vmatmul.mubr.bf16.gmra.mxu0 %v332
  %v583 = vpop.f32.mrf.mxu0
  %v584 = vadd.f32 %v88, %v583
  %v585 = vpop.f32.mrf.mxu0
  %v586 = vpop.f32.mrf.mxu0
  %v587 = vadd.f32 %v88, %v586
  %v588 = vpop.f32.mrf.mxu0
  %589 = vmatprep.mubr.bf16.mxu0 0
  %590 = vmatmul.mubr.bf16.gmra.mxu0 %v335
  %v591 = vpop.f32.mrf.mxu0
  %v592 = vadd.f32 %v88, %v591
  %v593 = vpop.f32.mrf.mxu0
  %v594 = vpop.f32.mrf.mxu0
  %v595 = vadd.f32 %v88, %v594
  %v596 = vpop.f32.mrf.mxu0
  %597 = vmatprep.mubr.bf16.mxu0 0
  %598 = vmatmul.mubr.bf16.gmra.mxu0 %v338
  %v599 = vpop.f32.mrf.mxu0
  %v600 = vadd.f32 %v88, %v599
  %v601 = vpop.f32.mrf.mxu0
  %v602 = vpop.f32.mrf.mxu0
  %v603 = vadd.f32 %v88, %v602
  %v604 = vpop.f32.mrf.mxu0
  %605 = vmatprep.mubr.bf16.mxu0 0
  %606 = vmatmul.mubr.bf16.gmra.mxu0 %v341
  %v607 = vpop.f32.mrf.mxu0
  %v608 = vadd.f32 %v88, %v607
  %v609 = vpop.f32.mrf.mxu0
  %v610 = vpop.f32.mrf.mxu0
  %v611 = vadd.f32 %v88, %v610
  %v612 = vpop.f32.mrf.mxu0
  %613 = vmatprep.mubr.bf16.mxu0 0
  %614 = vmatmul.mubr.bf16.gmra.mxu0 %v344
  %v615 = vpop.f32.mrf.mxu0
  %v616 = vadd.f32 %v88, %v615
  %v617 = vpop.f32.mrf.mxu0
  %v618 = vpop.f32.mrf.mxu0
  %v619 = vadd.f32 %v88, %v618
  %v620 = vpop.f32.mrf.mxu0
  %621 = vmatprep.mubr.bf16.mxu0 0
  %622 = vmatmul.mubr.bf16.gmra.mxu0 %v347
  %v623 = vpop.f32.mrf.mxu0
  %v624 = vadd.f32 %v88, %v623
  %v625 = vpop.f32.mrf.mxu0
  %v626 = vpop.f32.mrf.mxu0
  %v627 = vadd.f32 %v88, %v626
  %v628 = vpop.f32.mrf.mxu0
  %629 = vmatprep.mubr.bf16.mxu0 0
  %630 = vmatmul.mubr.bf16.gmra.mxu0 %v350
  %v631 = vpop.f32.mrf.mxu0
  %v632 = vadd.f32 %v88, %v631
  %v633 = vpop.f32.mrf.mxu0
  %v634 = vpop.f32.mrf.mxu0
  %v635 = vadd.f32 %v88, %v634
  %v636 = vpop.f32.mrf.mxu0
  %637 = vmatprep.mubr.bf16.mxu0 0
  %638 = vmatmul.mubr.bf16.gmra.mxu0 %v353
  %v639 = vpop.f32.mrf.mxu0
  %v640 = vadd.f32 %v88, %v639
  %v641 = vpop.f32.mrf.mxu0
  %v642 = vpop.f32.mrf.mxu0
  %v643 = vadd.f32 %v88, %v642
  %v644 = vpop.f32.mrf.mxu0
  %645 = vmatprep.mubr.bf16.mxu0 0
  %646 = vmatmul.mubr.bf16.gmra.mxu0 %v356
  %v647 = vpop.f32.mrf.mxu0
  %v648 = vadd.f32 %v88, %v647
  %v649 = vpop.f32.mrf.mxu0
  %v650 = vpop.f32.mrf.mxu0
  %v651 = vadd.f32 %v88, %v650
  %v652 = vpop.f32.mrf.mxu0
  %653 = vdwg.mxu0
  %v654 = vtanh.pop %v400
  %v655 = vtanh.pop %v403
  %v656 = vtanh.pop %v408
  %v657 = vtanh.pop %v411
  %v658 = vtanh.pop %v416
  %v659 = vtanh.pop %v419
  %v660 = vtanh.pop %v424
  %v661 = vtanh.pop %v427
  %v662 = vtanh.pop %v432
  %v663 = vtanh.pop %v435
  %v664 = vtanh.pop %v440
  %v665 = vtanh.pop %v443
  %v666 = vtanh.pop %v448
  %v667 = vtanh.pop %v451
  %v668 = vtanh.pop %v456
  %v669 = vtanh.pop %v459
  %v670 = vtanh.pop %v464
  %v671 = vtanh.pop %v467
  %v672 = vtanh.pop %v472
  %v673 = vtanh.pop %v475
  %v674 = vtanh.pop %v480
  %v675 = vtanh.pop %v483
  %v676 = vtanh.pop %v488
  %v677 = vtanh.pop %v491
  %v678 = vtanh.pop %v496
  %v679 = vtanh.pop %v499
  %v680 = vtanh.pop %v504
  %v681 = vtanh.pop %v507
  %v682 = vtanh.pop %v512
  %v683 = vtanh.pop %v515
  %v684 = vtanh.pop %v520
  %v685 = vtanh.pop %v523
  %v686 = vtanh.pop %v528
  %v687 = vtanh.pop %v531
  %v688 = vtanh.pop %v536
  %v689 = vtanh.pop %v539
  %v690 = vtanh.pop %v544
  %v691 = vtanh.pop %v547
  %v692 = vtanh.pop %v552
  %v693 = vtanh.pop %v555
  %v694 = vtanh.pop %v560
  %v695 = vtanh.pop %v563
  %v696 = vtanh.pop %v568
  %v697 = vtanh.pop %v571
  %v698 = vtanh.pop %v576
  %v699 = vtanh.pop %v579
  %v700 = vtanh.pop %v584
  %v701 = vtanh.pop %v587
  %v702 = vtanh.pop %v592
  %v703 = vtanh.pop %v595
  %v704 = vtanh.pop %v600
  %v705 = vtanh.pop %v603
  %v706 = vtanh.pop %v608
  %v707 = vtanh.pop %v611
  %v708 = vtanh.pop %v616
  %v709 = vtanh.pop %v619
  %v710 = vtanh.pop %v624
  %v711 = vtanh.pop %v627
  %v712 = vtanh.pop %v632
  %v713 = vtanh.pop %v635
  %v714 = vtanh.pop %v640
  %v715 = vtanh.pop %v643
  %v716 = vtanh.pop %v648
  %v717 = vtanh.pop %v651
  %vm718 = vcmask 64512
  %719 = vst.msk [vmem:[%s3] sm:$0xff] %vm718, %v654
  %720 = vst.msk [vmem:[%s3 + $0x8] sm:$0xff] %vm718, %v655
  %721 = vst.msk [vmem:[%s3 + $0x10] sm:$0xff] %vm718, %v656
  %722 = vst.msk [vmem:[%s3 + $0x18] sm:$0xff] %vm718, %v657
  %723 = vst.msk [vmem:[%s3 + $0x20] sm:$0xff] %vm718, %v658
  %724 = vst.msk [vmem:[%s3 + $0x28] sm:$0xff] %vm718, %v659
  %725 = vst.msk [vmem:[%s3 + $0x30] sm:$0xff] %vm718, %v660
  %726 = vst.msk [vmem:[%s3 + $0x38] sm:$0xff] %vm718, %v661
  %727 = vst.msk [vmem:[%s3 + $0x40] sm:$0xff] %vm718, %v662
  %728 = vst.msk [vmem:[%s3 + $0x48] sm:$0xff] %vm718, %v663
  %729 = vst.msk [vmem:[%s3 + $0x50] sm:$0xff] %vm718, %v664
  %730 = vst.msk [vmem:[%s3 + $0x58] sm:$0xff] %vm718, %v665
  %731 = vst.msk [vmem:[%s3 + $0x60] sm:$0xff] %vm718, %v666
  %732 = vst.msk [vmem:[%s3 + $0x68] sm:$0xff] %vm718, %v667
  %733 = vst.msk [vmem:[%s3 + $0x70] sm:$0xff] %vm718, %v668
  %734 = vst.msk [vmem:[%s3 + $0x78] sm:$0xff] %vm718, %v669
  %735 = vst.msk [vmem:[%s3 + $0x80] sm:$0xff] %vm718, %v670
  %736 = vst.msk [vmem:[%s3 + $0x88] sm:$0xff] %vm718, %v671
  %737 = vst.msk [vmem:[%s3 + $0x90] sm:$0xff] %vm718, %v672
  %738 = vst.msk [vmem:[%s3 + $0x98] sm:$0xff] %vm718, %v673
  %739 = vst.msk [vmem:[%s3 + $0xa0] sm:$0xff] %vm718, %v674
  %740 = vst.msk [vmem:[%s3 + $0xa8] sm:$0xff] %vm718, %v675
  %741 = vst.msk [vmem:[%s3 + $0xb0] sm:$0xff] %vm718, %v676
  %742 = vst.msk [vmem:[%s3 + $0xb8] sm:$0xff] %vm718, %v677
  %743 = vst.msk [vmem:[%s3 + $0xc0] sm:$0xff] %vm718, %v678
  %744 = vst.msk [vmem:[%s3 + $0xc8] sm:$0xff] %vm718, %v679
  %745 = vst.msk [vmem:[%s3 + $0xd0] sm:$0xff] %vm718, %v680
  %746 = vst.msk [vmem:[%s3 + $0xd8] sm:$0xff] %vm718, %v681
  %747 = vst.msk [vmem:[%s3 + $0xe0] sm:$0xff] %vm718, %v682
  %748 = vst.msk [vmem:[%s3 + $0xe8] sm:$0xff] %vm718, %v683
  %749 = vst.msk [vmem:[%s3 + $0xf0] sm:$0xff] %vm718, %v684
  %750 = vst.msk [vmem:[%s3 + $0xf8] sm:$0xff] %vm718, %v685
  %751 = vst.msk [vmem:[%s3 + $0x100] sm:$0xff] %vm718, %v686
  %752 = vst.msk [vmem:[%s3 + $0x108] sm:$0xff] %vm718, %v687
  %753 = vst.msk [vmem:[%s3 + $0x110] sm:$0xff] %vm718, %v688
  %754 = vst.msk [vmem:[%s3 + $0x118] sm:$0xff] %vm718, %v689
  %755 = vst.msk [vmem:[%s3 + $0x120] sm:$0xff] %vm718, %v690
  %756 = vst.msk [vmem:[%s3 + $0x128] sm:$0xff] %vm718, %v691
  %757 = vst.msk [vmem:[%s3 + $0x130] sm:$0xff] %vm718, %v692
  %758 = vst.msk [vmem:[%s3 + $0x138] sm:$0xff] %vm718, %v693
  %759 = vst.msk [vmem:[%s3 + $0x140] sm:$0xff] %vm718, %v694
  %760 = vst.msk [vmem:[%s3 + $0x148] sm:$0xff] %vm718, %v695
  %761 = vst.msk [vmem:[%s3 + $0x150] sm:$0xff] %vm718, %v696
  %762 = vst.msk [vmem:[%s3 + $0x158] sm:$0xff] %vm718, %v697
  %763 = vst.msk [vmem:[%s3 + $0x160] sm:$0xff] %vm718, %v698
  %764 = vst.msk [vmem:[%s3 + $0x168] sm:$0xff] %vm718, %v699
  %765 = vst.msk [vmem:[%s3 + $0x170] sm:$0xff] %vm718, %v700
  %766 = vst.msk [vmem:[%s3 + $0x178] sm:$0xff] %vm718, %v701
  %767 = vst.msk [vmem:[%s3 + $0x180] sm:$0xff] %vm718, %v702
  %768 = vst.msk [vmem:[%s3 + $0x188] sm:$0xff] %vm718, %v703
  %769 = vst.msk [vmem:[%s3 + $0x190] sm:$0xff] %vm718, %v704
  %770 = vst.msk [vmem:[%s3 + $0x198] sm:$0xff] %vm718, %v705
  %771 = vst.msk [vmem:[%s3 + $0x1a0] sm:$0xff] %vm718, %v706
  %772 = vst.msk [vmem:[%s3 + $0x1a8] sm:$0xff] %vm718, %v707
  %773 = vst.msk [vmem:[%s3 + $0x1b0] sm:$0xff] %vm718, %v708
  %774 = vst.msk [vmem:[%s3 + $0x1b8] sm:$0xff] %vm718, %v709
  %775 = vst.msk [vmem:[%s3 + $0x1c0] sm:$0xff] %vm718, %v710
  %776 = vst.msk [vmem:[%s3 + $0x1c8] sm:$0xff] %vm718, %v711
  %777 = vst.msk [vmem:[%s3 + $0x1d0] sm:$0xff] %vm718, %v712
  %778 = vst.msk [vmem:[%s3 + $0x1d8] sm:$0xff] %vm718, %v713
  %779 = vst.msk [vmem:[%s3 + $0x1e0] sm:$0xff] %vm718, %v714
  %780 = vst.msk [vmem:[%s3 + $0x1e8] sm:$0xff] %vm718, %v715
  %781 = vst.msk [vmem:[%s3 + $0x1f0] sm:$0xff] %vm718, %v716
  %782 = vst.msk [vmem:[%s3 + $0x1f8] sm:$0xff] %vm718, %v717
  // Predicated region
  $region14: #{liif_forward.2} parent=0 // pred_check
    _
  $region15: #{liif_forward.2} parent=0 // pred_check_branch
    %784 = sbr.rel (0) target = $region17
  $region16: #{liif_forward.2} parent=0 // pred_region
    _
  $region17: #{liif_forward.2} parent=0 // pred_fallthru
    _
  // Predicated region
  $region18: #{liif_forward.2} parent=0 // pred_check
    _
  $region19: #{liif_forward.2} parent=0 // pred_check_branch
    %786 = sbr.rel (0) target = $region21
  $region20: #{liif_forward.2} parent=0 // pred_region
    _
  $region21: #{liif_forward.2} parent=0 // pred_fallthru
    _

// kernel: liif_forward.3
$region0: #{liif_forward.3}
  #allocation0 [shape = 'u32[]', space=smem, size = 0x4, offset = 0x4, fixed_abs, tag = 'smem constant byte address 0x4 - core index']
  #allocation1 [shape = 'u32[144,128]{1,0:T(1,128)}', space=vmem, size = 0x12000, scoped, tag = 'internal scratch']
  %s0 = inlined_call_operand.vmem [shape: bf16[4,64,76], index: 0, kind: input, shape index: {}]
  %s1 = inlined_call_operand.vmem [shape: f32[4,64,1], index: 1, kind: input, shape index: {}]
  %s2 = inlined_call_operand.vmem [shape: bf16[76,32], index: 2, kind: input, shape index: {}]
  %s3 = inlined_call_operand.vmem [shape: f32[1,32], index: 3, kind: input, shape index: {}]
  %s4 = inlined_call_operand.vmem [shape: bf16[32,32], index: 4, kind: input, shape index: {}]
  %s5 = inlined_call_operand.vmem [shape: f32[1,32], index: 5, kind: input, shape index: {}]
  %s6 = inlined_call_operand.vmem [shape: bf16[32,8], index: 6, kind: input, shape index: {}]
  %s7 = inlined_call_operand.vmem [shape: f32[1,8], index: 7, kind: input, shape index: {}]
  %s8 = inlined_call_operand.vmem [shape: f32[64,8], index: 8, kind: output, shape index: {}]
  %s9 = sld [smem:[#allocation0]]
  $region42: #{liif_forward.3} parent=0
    _
  %s11 = ssub.s32 1, %s9
  %s12 = scalar_select 0, %s11, %s9
  // Predicated region
  $region2: #{liif_forward.3} parent=0 // pred_check
    _
  $region3: #{liif_forward.3} parent=0 // pred_check_branch
    %14 = sbr.rel (0) target = $region5
  $region4: #{liif_forward.3} parent=0 // pred_region
    _
  $region5: #{liif_forward.3} parent=0 // pred_fallthru
    _
  // Predicated region
  $region6: #{liif_forward.3} parent=0 // pred_check
    _
  $region7: #{liif_forward.3} parent=0 // pred_check_branch
    %16 = sbr.rel (0) target = $region9
  $region8: #{liif_forward.3} parent=0 // pred_region
    _
  $region9: #{liif_forward.3} parent=0 // pred_fallthru
    _
  // Predicated region
  $region10: #{liif_forward.3} parent=0 // pred_check
    _
  $region11: #{liif_forward.3} parent=0 // pred_check_branch
    %18 = sbr.rel (0) target = $region13
  $region12: #{liif_forward.3} parent=0 // pred_region
    _
  $region13: #{liif_forward.3} parent=0 // pred_fallthru
    _
  // Predicated region
  $region14: #{liif_forward.3} parent=0 // pred_check
    _
  $region15: #{liif_forward.3} parent=0 // pred_check_branch
    %20 = sbr.rel (0) target = $region17
  $region16: #{liif_forward.3} parent=0 // pred_region
    _
  $region17: #{liif_forward.3} parent=0 // pred_fallthru
    _
  // Predicated region
  $region18: #{liif_forward.3} parent=0 // pred_check
    _
  $region19: #{liif_forward.3} parent=0 // pred_check_branch
    %22 = sbr.rel (0) target = $region21
  $region20: #{liif_forward.3} parent=0 // pred_region
    _
  $region21: #{liif_forward.3} parent=0 // pred_fallthru
    _
  // Predicated region
  $region22: #{liif_forward.3} parent=0 // pred_check
    _
  $region23: #{liif_forward.3} parent=0 // pred_check_branch
    %24 = sbr.rel (0) target = $region25
  $region24: #{liif_forward.3} parent=0 // pred_region
    _
  $region25: #{liif_forward.3} parent=0 // pred_fallthru
    _
  // Predicated region
  $region26: #{liif_forward.3} parent=0 // pred_check
    _
  $region27: #{liif_forward.3} parent=0 // pred_check_branch
    %26 = sbr.rel (0) target = $region29
  $region28: #{liif_forward.3} parent=0 // pred_region
    _
  $region29: #{liif_forward.3} parent=0 // pred_fallthru
    _
  // Predicated region
  $region30: #{liif_forward.3} parent=0 // pred_check
    _
  $region31: #{liif_forward.3} parent=0 // pred_check_branch
    %28 = sbr.rel (0) target = $region33
  $region32: #{liif_forward.3} parent=0 // pred_region
    _
  $region33: #{liif_forward.3} parent=0 // pred_fallthru
    _
  %v30 = vld [vmem:[%s0] sm:$0xf]
  %v31 = vld [vmem:[%s0 + $0x4] sm:$0xf]
  %v32 = vld [vmem:[%s0 + $0x8] sm:$0xf]
  %v33 = vld [vmem:[%s0 + $0xc] sm:$0xf]
  %v34 = vld [vmem:[%s0 + $0x10] sm:$0xf]
  %v35 = vld [vmem:[%s0 + $0x14] sm:$0xf]
  %v36 = vld [vmem:[%s0 + $0x18] sm:$0xf]
  %v37 = vld [vmem:[%s0 + $0x1c] sm:$0xf]
  %v38 = vld [vmem:[%s0 + $0x20] sm:$0xf]
  %v39 = vld [vmem:[%s0 + $0x24] sm:$0xf]
  %v40 = vld [vmem:[%s0 + $0x28] sm:$0xf]
  %v41 = vld [vmem:[%s0 + $0x2c] sm:$0xf]
  %v42 = vld [vmem:[%s0 + $0x30] sm:$0xf]
  %v43 = vld [vmem:[%s0 + $0x34] sm:$0xf]
  %v44 = vld [vmem:[%s0 + $0x38] sm:$0xf]
  %v45 = vld [vmem:[%s0 + $0x3c] sm:$0xf]
  %v46 = vld [vmem:[%s0 + $0x40] sm:$0xf]
  %v47 = vld [vmem:[%s0 + $0x44] sm:$0xf]
  %v48 = vld [vmem:[%s0 + $0x48] sm:$0xf]
  %v49 = vld [vmem:[%s0 + $0x4c] sm:$0xf]
  %v50 = vld [vmem:[%s0 + $0x50] sm:$0xf]
  %v51 = vld [vmem:[%s0 + $0x54] sm:$0xf]
  %v52 = vld [vmem:[%s0 + $0x58] sm:$0xf]
  %v53 = vld [vmem:[%s0 + $0x5c] sm:$0xf]
  %v54 = vld [vmem:[%s0 + $0x60] sm:$0xf]
  %v55 = vld [vmem:[%s0 + $0x64] sm:$0xf]
  %v56 = vld [vmem:[%s0 + $0x68] sm:$0xf]
  %v57 = vld [vmem:[%s0 + $0x6c] sm:$0xf]
  %v58 = vld [vmem:[%s0 + $0x70] sm:$0xf]
  %v59 = vld [vmem:[%s0 + $0x74] sm:$0xf]
  %v60 = vld [vmem:[%s0 + $0x78] sm:$0xf]
  %v61 = vld [vmem:[%s0 + $0x7c] sm:$0xf]
  %v62 = vld [vmem:[%s2] sm:$0xf]
  %v63 = vld [vmem:[%s2 + $0x4] sm:$0xf]
  %v64 = vld [vmem:[%s2 + $0x8] sm:$0xf]
  %v65 = vld [vmem:[%s2 + $0xc] sm:$0xf]
  %v66 = vld [vmem:[%s2 + $0x10] sm:$0xf]
  %v67 = vld [vmem:[%s2 + $0x14] sm:$0xf]
  %v68 = vld [vmem:[%s2 + $0x18] sm:$0xf]
  %v69 = vld [vmem:[%s2 + $0x1c] sm:$0xf]
  %v70 = vld [vmem:[%s2 + $0x20] sm:$0xf]
  %v71 = vld [vmem:[%s2 + $0x24] sm:$0x3]
  %v72 = vld [vmem:[%s3] sm:$0x1]
  %v73 = vld [vmem:[%s4] sm:$0xf]
  %v74 = vld [vmem:[%s4 + $0x4] sm:$0xf]
  %v75 = vld [vmem:[%s4 + $0x8] sm:$0xf]
  %v76 = vld [vmem:[%s4 + $0xc] sm:$0xf]
  %v77 = vld [vmem:[%s5] sm:$0x1]
  %v78 = vld [vmem:[%s6] sm:$0xf]
  %v79 = vld [vmem:[%s6 + $0x4] sm:$0xf]
  %v80 = vld [vmem:[%s6 + $0x8] sm:$0xf]
  %v81 = vld [vmem:[%s6 + $0xc] sm:$0xf]
  %v82 = vld [vmem:[%s7] sm:$0x1]
  %v84 = vlaneseq
  %v85 = vshrl.u32 %v84, 7
  %v86 = vsub.s32 0, %v85
  %v87 = vrot.slane %v72, %v86
  %v121 = vunpack.c.l.b16 %v30
  %v122 = vunpack.c.l.b16 %v31
  %v123 = vunpack.c.l.b16 %v32
  %v124 = vunpack.c.l.b16 %v33
  %v125 = vunpack.c.l.b16 %v34
  %v126 = vunpack.c.l.b16 %v35
  %v127 = vunpack.c.l.b16 %v36
  %v128 = vunpack.c.l.b16 %v37
  %v129 = vunpack.c.l.b16 %v38
  %v130 = vunpack.c.l.b16 %v39
  %v131 = vunpack.c.l.b16 %v40
  %v132 = vunpack.c.l.b16 %v41
  %v133 = vunpack.c.l.b16 %v42
  %v134 = vunpack.c.l.b16 %v43
  %v135 = vunpack.c.l.b16 %v44
  %v136 = vunpack.c.l.b16 %v45
  %v137 = vunpack.c.l.b16 %v46
  %v138 = vunpack.c.l.b16 %v47
  %v139 = vunpack.c.l.b16 %v48
  %v140 = vunpack.c.l.b16 %v49
  %v141 = vunpack.c.l.b16 %v50
  %v142 = vunpack.c.l.b16 %v51
  %v143 = vunpack.c.l.b16 %v52
  %v144 = vunpack.c.l.b16 %v53
  %v145 = vunpack.c.l.b16 %v54
  %v146 = vunpack.c.l.b16 %v55
  %v147 = vunpack.c.l.b16 %v56
  %v148 = vunpack.c.l.b16 %v57
  %v149 = vunpack.c.l.b16 %v58
  %v150 = vunpack.c.l.b16 %v59
  %v151 = vunpack.c.l.b16 %v60
  %v152 = vunpack.c.l.b16 %v61
  %v153 = vpack.c.b16 %v122, %v121
  %v154 = vpack.c.b16 %v124, %v123
  %v155 = vpack.c.b16 %v126, %v125
  %v156 = vpack.c.b16 %v128, %v127
  %v157 = vpack.c.b16 %v130, %v129
  %v158 = vpack.c.b16 %v132, %v131
  %v159 = vpack.c.b16 %v134, %v133
  %v160 = vpack.c.b16 %v136, %v135
  %v161 = vpack.c.b16 %v138, %v137
  %v162 = vpack.c.b16 %v140, %v139
  %v163 = vpack.c.b16 %v142, %v141
  %v164 = vpack.c.b16 %v144, %v143
  %v165 = vpack.c.b16 %v146, %v145
  %v166 = vpack.c.b16 %v148, %v147
  %v167 = vpack.c.b16 %v150, %v149
  %v168 = vpack.c.b16 %v152, %v151
  %v179 = vunpack.c.l.b16 %v62
  %v180 = vunpack.c.l.b16 %v63
  %v181 = vunpack.c.l.b16 %v64
  %v182 = vunpack.c.l.b16 %v65
  %v183 = vunpack.c.l.b16 %v66
  %v184 = vunpack.c.l.b16 %v67
  %v185 = vunpack.c.l.b16 %v68
  %v186 = vunpack.c.l.b16 %v69
  %v187 = vunpack.c.l.b16 %v70
  %v188 = vunpack.c.l.b16 %v71
  %v189 = vpack.c.b16 %v180, %v179
  %v190 = vpack.c.b16 %v182, %v181
  %v191 = vpack.c.b16 %v184, %v183
  %v192 = vpack.c.b16 %v186, %v185
  %v193 = vpack.c.b16 %v188, %v187
  %vm198 = vcmask 621568
  %v200 = vsel %vm198, %v153, 0
  %v203 = vsel %vm198, %v154, 0
  %v206 = vsel %vm198, %v155, 0
  %v209 = vsel %vm198, %v156, 0
  %v212 = vsel %vm198, %v157, 0
  %v215 = vsel %vm198, %v158, 0
  %v218 = vsel %vm198, %v159, 0
  %v221 = vsel %vm198, %v160, 0
  %v224 = vsel %vm198, %v161, 0
  %v227 = vsel %vm198, %v162, 0
  %v230 = vsel %vm198, %v163, 0
  %v233 = vsel %vm198, %v164, 0
  %v236 = vsel %vm198, %v165, 0
  %v239 = vsel %vm198, %v166, 0
  %v242 = vsel %vm198, %v167, 0
  %v245 = vsel %vm198, %v168, 0
  %vm247 = vcmask 1045504
  %v249 = vsel %vm247, %v193, 0
  %251 = vmatprep.subr.bf16.mxu0 0
  %252 = vmatpush1.bf16.msra.mxu0 0
  %253 = vmatprep.subr.bf16.mxu0 0
  %254 = vmatpush1.bf16.msra.mxu0 0
  %255 = vmatprep.subr.bf16.mxu0 0
  %256 = vmatpush1.bf16.msra.mxu0 0
  %257 = vmatprep.subr.bf16.mxu0 0
  %258 = vmatpush1.bf16.msra.mxu0 %v249
  %259 = vmatprep.subr.bf16.mxu0 0
  %260 = vmatpush1.bf16.msra.mxu0 %v192
  %261 = vmatprep.subr.bf16.mxu0 0
  %262 = vmatpush1.bf16.msra.mxu0 %v191
  %263 = vmatprep.subr.bf16.mxu0 0
  %264 = vmatpush1.bf16.msra.mxu0 %v190
  %265 = vmatprep.subr.bf16.mxu0 0
  %266 = vmatpush1.bf16.msra.mxu0 %v189
  %267 = vmatprep.subr.bf16.mxu0 0
  %268 = vmatpush2.bf16.msra.mxu0 0
  %269 = vmatprep.subr.bf16.mxu0 0
  %270 = vmatpush2.bf16.msra.mxu0 0
  %271 = vmatprep.subr.bf16.mxu0 0
  %272 = vmatpush2.bf16.msra.mxu0 0
  %273 = vmatprep.subr.bf16.mxu0 0
  %274 = vmatpush2.bf16.msra.mxu0 0
  %275 = vmatprep.subr.bf16.mxu0 0
  %276 = vmatpush2.bf16.msra.mxu0 0
  %277 = vmatprep.subr.bf16.mxu0 0
  %278 = vmatpush2.bf16.msra.mxu0 0
  %279 = vmatprep.subr.bf16.mxu0 0
  %280 = vmatpush2.bf16.msra.mxu0 0
  %281 = vmatprep.subr.bf16.mxu0 0
  %282 = vmatpush2.bf16.msra.mxu0 0
  %283 = vmatprep.mubr.bf16.mxu0 0
  %284 = vmatmul.mubr.bf16.gmra.mxu0 %v200
  %v285 = vpop.f32.mrf.mxu0
  %v286 = vadd.f32 %v87, %v285
  %v287 = vpop.f32.mrf.mxu0
  %v288 = vpop.f32.mrf.mxu0
  %v289 = vadd.f32 %v87, %v288
  %v290 = vpop.f32.mrf.mxu0
  %291 = vmatprep.mubr.bf16.mxu0 0
  %292 = vmatmul.mubr.bf16.gmra.mxu0 %v203
  %v293 = vpop.f32.mrf.mxu0
  %v294 = vadd.f32 %v87, %v293
  %v295 = vpop.f32.mrf.mxu0
  %v296 = vpop.f32.mrf.mxu0
  %v297 = vadd.f32 %v87, %v296
  %v298 = vpop.f32.mrf.mxu0
  %299 = vmatprep.mubr.bf16.mxu0 0
  %300 = vmatmul.mubr.bf16.gmra.mxu0 %v206
  %v301 = vpop.f32.mrf.mxu0
  %v302 = vadd.f32 %v87, %v301
  %v303 = vpop.f32.mrf.mxu0
  %v304 = vpop.f32.mrf.mxu0
  %v305 = vadd.f32 %v87, %v304
  %v306 = vpop.f32.mrf.mxu0
  %307 = vmatprep.mubr.bf16.mxu0 0
  %308 = vmatmul.mubr.bf16.gmra.mxu0 %v209
  %v309 = vpop.f32.mrf.mxu0
  %v310 = vadd.f32 %v87, %v309
  %v311 = vpop.f32.mrf.mxu0
  %v312 = vpop.f32.mrf.mxu0
  %v313 = vadd.f32 %v87, %v312
  %v314 = vpop.f32.mrf.mxu0
  %315 = vmatprep.mubr.bf16.mxu0 0
  %316 = vmatmul.mubr.bf16.gmra.mxu0 %v212
  %v317 = vpop.f32.mrf.mxu0
  %v318 = vadd.f32 %v87, %v317
  %v319 = vpop.f32.mrf.mxu0
  %v320 = vpop.f32.mrf.mxu0
  %v321 = vadd.f32 %v87, %v320
  %v322 = vpop.f32.mrf.mxu0
  %323 = vmatprep.mubr.bf16.mxu0 0
  %324 = vmatmul.mubr.bf16.gmra.mxu0 %v215
  %v325 = vpop.f32.mrf.mxu0
  %v326 = vadd.f32 %v87, %v325
  %v327 = vpop.f32.mrf.mxu0
  %v328 = vpop.f32.mrf.mxu0
  %v329 = vadd.f32 %v87, %v328
  %v330 = vpop.f32.mrf.mxu0
  %331 = vmatprep.mubr.bf16.mxu0 0
  %332 = vmatmul.mubr.bf16.gmra.mxu0 %v218
  %v333 = vpop.f32.mrf.mxu0
  %v334 = vadd.f32 %v87, %v333
  %v335 = vpop.f32.mrf.mxu0
  %v336 = vpop.f32.mrf.mxu0
  %v337 = vadd.f32 %v87, %v336
  %v338 = vpop.f32.mrf.mxu0
  %339 = vmatprep.mubr.bf16.mxu0 0
  %340 = vmatmul.mubr.bf16.gmra.mxu0 %v221
  %v341 = vpop.f32.mrf.mxu0
  %v342 = vadd.f32 %v87, %v341
  %v343 = vpop.f32.mrf.mxu0
  %v344 = vpop.f32.mrf.mxu0
  %v345 = vadd.f32 %v87, %v344
  %v346 = vpop.f32.mrf.mxu0
  %347 = vmatprep.mubr.bf16.mxu0 0
  %348 = vmatmul.mubr.bf16.gmra.mxu0 %v224
  %v349 = vpop.f32.mrf.mxu0
  %v350 = vadd.f32 %v87, %v349
  %v351 = vpop.f32.mrf.mxu0
  %v352 = vpop.f32.mrf.mxu0
  %v353 = vadd.f32 %v87, %v352
  %v354 = vpop.f32.mrf.mxu0
  %355 = vmatprep.mubr.bf16.mxu0 0
  %356 = vmatmul.mubr.bf16.gmra.mxu0 %v227
  %v357 = vpop.f32.mrf.mxu0
  %v358 = vadd.f32 %v87, %v357
  %v359 = vpop.f32.mrf.mxu0
  %v360 = vpop.f32.mrf.mxu0
  %v361 = vadd.f32 %v87, %v360
  %v362 = vpop.f32.mrf.mxu0
  %363 = vmatprep.mubr.bf16.mxu0 0
  %364 = vmatmul.mubr.bf16.gmra.mxu0 %v230
  %v365 = vpop.f32.mrf.mxu0
  %v366 = vadd.f32 %v87, %v365
  %v367 = vpop.f32.mrf.mxu0
  %v368 = vpop.f32.mrf.mxu0
  %v369 = vadd.f32 %v87, %v368
  %v370 = vpop.f32.mrf.mxu0
  %371 = vmatprep.mubr.bf16.mxu0 0
  %372 = vmatmul.mubr.bf16.gmra.mxu0 %v233
  %v373 = vpop.f32.mrf.mxu0
  %v374 = vadd.f32 %v87, %v373
  %v375 = vpop.f32.mrf.mxu0
  %v376 = vpop.f32.mrf.mxu0
  %v377 = vadd.f32 %v87, %v376
  %v378 = vpop.f32.mrf.mxu0
  %379 = vmatprep.mubr.bf16.mxu0 0
  %380 = vmatmul.mubr.bf16.gmra.mxu0 %v236
  %v381 = vpop.f32.mrf.mxu0
  %v382 = vadd.f32 %v87, %v381
  %v383 = vpop.f32.mrf.mxu0
  %v384 = vpop.f32.mrf.mxu0
  %v385 = vadd.f32 %v87, %v384
  %v386 = vpop.f32.mrf.mxu0
  %387 = vmatprep.mubr.bf16.mxu0 0
  %388 = vmatmul.mubr.bf16.gmra.mxu0 %v239
  %v389 = vpop.f32.mrf.mxu0
  %v390 = vadd.f32 %v87, %v389
  %v391 = vpop.f32.mrf.mxu0
  %v392 = vpop.f32.mrf.mxu0
  %v393 = vadd.f32 %v87, %v392
  %v394 = vpop.f32.mrf.mxu0
  %395 = vmatprep.mubr.bf16.mxu0 0
  %396 = vmatmul.mubr.bf16.gmra.mxu0 %v242
  %v397 = vpop.f32.mrf.mxu0
  %v398 = vadd.f32 %v87, %v397
  %v399 = vpop.f32.mrf.mxu0
  %v400 = vpop.f32.mrf.mxu0
  %v401 = vadd.f32 %v87, %v400
  %v402 = vpop.f32.mrf.mxu0
  %403 = vmatprep.mubr.bf16.mxu0 0
  %404 = vmatmul.mubr.bf16.gmra.mxu0 %v245
  %v405 = vpop.f32.mrf.mxu0
  %v406 = vadd.f32 %v87, %v405
  %v407 = vpop.f32.mrf.mxu0
  %v408 = vpop.f32.mrf.mxu0
  %v409 = vadd.f32 %v87, %v408
  %v410 = vpop.f32.mrf.mxu0
  %411 = vdwg.mxu0
  %v412 = vmax.f32 %v286, 0.0
  %v413 = vmax.f32 %v289, 0.0
  %v414 = vmax.f32 %v294, 0.0
  %v415 = vmax.f32 %v297, 0.0
  %v416 = vmax.f32 %v302, 0.0
  %v417 = vmax.f32 %v305, 0.0
  %v418 = vmax.f32 %v310, 0.0
  %v419 = vmax.f32 %v313, 0.0
  %v420 = vmax.f32 %v318, 0.0
  %v421 = vmax.f32 %v321, 0.0
  %v422 = vmax.f32 %v326, 0.0
  %v423 = vmax.f32 %v329, 0.0
  %v424 = vmax.f32 %v334, 0.0
  %v425 = vmax.f32 %v337, 0.0
  %v426 = vmax.f32 %v342, 0.0
  %v427 = vmax.f32 %v345, 0.0
  %v428 = vmax.f32 %v350, 0.0
  %v429 = vmax.f32 %v353, 0.0
  %v430 = vmax.f32 %v358, 0.0
  %v431 = vmax.f32 %v361, 0.0
  %v432 = vmax.f32 %v366, 0.0
  %v433 = vmax.f32 %v369, 0.0
  %v434 = vmax.f32 %v374, 0.0
  %v435 = vmax.f32 %v377, 0.0
  %v436 = vmax.f32 %v382, 0.0
  %v437 = vmax.f32 %v385, 0.0
  %v438 = vmax.f32 %v390, 0.0
  %v439 = vmax.f32 %v393, 0.0
  %v440 = vmax.f32 %v398, 0.0
  %v441 = vmax.f32 %v401, 0.0
  %v442 = vmax.f32 %v406, 0.0
  %v443 = vmax.f32 %v409, 0.0
  %v444 = vpack.c.bf16 %v413, %v412
  %v445 = vpack.c.bf16 %v415, %v414
  %v446 = vpack.c.bf16 %v417, %v416
  %v447 = vpack.c.bf16 %v419, %v418
  %v448 = vpack.c.bf16 %v421, %v420
  %v449 = vpack.c.bf16 %v423, %v422
  %v450 = vpack.c.bf16 %v425, %v424
  %v451 = vpack.c.bf16 %v427, %v426
  %v452 = vpack.c.bf16 %v429, %v428
  %v453 = vpack.c.bf16 %v431, %v430
  %v454 = vpack.c.bf16 %v433, %v432
  %v455 = vpack.c.bf16 %v435, %v434
  %v456 = vpack.c.bf16 %v437, %v436
  %v457 = vpack.c.bf16 %v439, %v438
  %v458 = vpack.c.bf16 %v441, %v440
  %v459 = vpack.c.bf16 %v443, %v442
  %v461 = vlaneseq
  %v462 = vshrl.u32 %v461, 7
  %v463 = vsub.s32 0, %v462
  %v464 = vrot.slane %v77, %v463
  %v470 = vunpack.c.l.b16 %v73
  %v471 = vunpack.c.l.b16 %v74
  %v472 = vunpack.c.l.b16 %v75
  %v473 = vunpack.c.l.b16 %v76
  %v474 = vpack.c.b16 %v471, %v470
  %v475 = vpack.c.b16 %v473, %v472
  %vm478 = vcmask 261120
  %v480 = vsel %vm478, %v444, 0
  %v483 = vsel %vm478, %v445, 0
  %v486 = vsel %vm478, %v446, 0
  %v489 = vsel %vm478, %v447, 0
  %v492 = vsel %vm478, %v448, 0
  %v495 = vsel %vm478, %v449, 0
  %v498 = vsel %vm478, %v450, 0
  %v501 = vsel %vm478, %v451, 0
  %v504 = vsel %vm478, %v452, 0
  %v507 = vsel %vm478, %v453, 0
  %v510 = vsel %vm478, %v454, 0
  %v513 = vsel %vm478, %v455, 0
  %v516 = vsel %vm478, %v456, 0
  %v519 = vsel %vm478, %v457, 0
  %v522 = vsel %vm478, %v458, 0
  %v525 = vsel %vm478, %v459, 0
  %527 = vmatprep.subr.bf16.mxu0 0
  %528 = vmatpush1.bf16.msra.mxu0 0
  %529 = vmatprep.subr.bf16.mxu0 0
  %530 = vmatpush1.bf16.msra.mxu0 0
  %531 = vmatprep.subr.bf16.mxu0 0
  %532 = vmatpush1.bf16.msra.mxu0 0
  %533 = vmatprep.subr.bf16.mxu0 0
  %534 = vmatpush1.bf16.msra.mxu0 0
  %535 = vmatprep.subr.bf16.mxu0 0
  %536 = vmatpush1.bf16.msra.mxu0 0
  %537 = vmatprep.subr.bf16.mxu0 0
  %538 = vmatpush1.bf16.msra.mxu0 0
  %539 = vmatprep.subr.bf16.mxu0 0
  %540 = vmatpush1.bf16.msra.mxu0 %v475
  %541 = vmatprep.subr.bf16.mxu0 0
  %542 = vmatpush1.bf16.msra.mxu0 %v474
  %543 = vmatprep.subr.bf16.mxu0 0
  %544 = vmatpush2.bf16.msra.mxu0 0
  %545 = vmatprep.subr.bf16.mxu0 0
  %546 = vmatpush2.bf16.msra.mxu0 0
  %547 = vmatprep.subr.bf16.mxu0 0
  %548 = vmatpush2.bf16.msra.mxu0 0
  %549 = vmatprep.subr.bf16.mxu0 0
  %550 = vmatpush2.bf16.msra.mxu0 0
  %551 = vmatprep.subr.bf16.mxu0 0
  %552 = vmatpush2.bf16.msra.mxu0 0
  %553 = vmatprep.subr.bf16.mxu0 0
  %554 = vmatpush2.bf16.msra.mxu0 0
  %555 = vmatprep.subr.bf16.mxu0 0
  %556 = vmatpush2.bf16.msra.mxu0 0
  %557 = vmatprep.subr.bf16.mxu0 0
  %558 = vmatpush2.bf16.msra.mxu0 0
  %559 = vmatprep.mubr.bf16.mxu0 0
  %560 = vmatmul.mubr.bf16.gmra.mxu0 %v480
  %v561 = vpop.f32.mrf.mxu0
  %v562 = vadd.f32 %v464, %v561
  %v563 = vpop.f32.mrf.mxu0
  %v564 = vpop.f32.mrf.mxu0
  %v565 = vadd.f32 %v464, %v564
  %v566 = vpop.f32.mrf.mxu0
  %567 = vmatprep.mubr.bf16.mxu0 0
  %568 = vmatmul.mubr.bf16.gmra.mxu0 %v483
  %v569 = vpop.f32.mrf.mxu0
  %v570 = vadd.f32 %v464, %v569
  %v571 = vpop.f32.mrf.mxu0
  %v572 = vpop.f32.mrf.mxu0
  %v573 = vadd.f32 %v464, %v572
  %v574 = vpop.f32.mrf.mxu0
  %575 = vmatprep.mubr.bf16.mxu0 0
  %576 = vmatmul.mubr.bf16.gmra.mxu0 %v486
  %v577 = vpop.f32.mrf.mxu0
  %v578 = vadd.f32 %v464, %v577
  %v579 = vpop.f32.mrf.mxu0
  %v580 = vpop.f32.mrf.mxu0
  %v581 = vadd.f32 %v464, %v580
  %v582 = vpop.f32.mrf.mxu0
  %583 = vmatprep.mubr.bf16.mxu0 0
  %584 = vmatmul.mubr.bf16.gmra.mxu0 %v489
  %v585 = vpop.f32.mrf.mxu0
  %v586 = vadd.f32 %v464, %v585
  %v587 = vpop.f32.mrf.mxu0
  %v588 = vpop.f32.mrf.mxu0
  %v589 = vadd.f32 %v464, %v588
  %v590 = vpop.f32.mrf.mxu0
  %591 = vmatprep.mubr.bf16.mxu0 0
  %592 = vmatmul.mubr.bf16.gmra.mxu0 %v492
  %v593 = vpop.f32.mrf.mxu0
  %v594 = vadd.f32 %v464, %v593
  %v595 = vpop.f32.mrf.mxu0
  %v596 = vpop.f32.mrf.mxu0
  %v597 = vadd.f32 %v464, %v596
  %v598 = vpop.f32.mrf.mxu0
  %599 = vmatprep.mubr.bf16.mxu0 0
  %600 = vmatmul.mubr.bf16.gmra.mxu0 %v495
  %v601 = vpop.f32.mrf.mxu0
  %v602 = vadd.f32 %v464, %v601
  %v603 = vpop.f32.mrf.mxu0
  %v604 = vpop.f32.mrf.mxu0
  %v605 = vadd.f32 %v464, %v604
  %v606 = vpop.f32.mrf.mxu0
  %607 = vmatprep.mubr.bf16.mxu0 0
  %608 = vmatmul.mubr.bf16.gmra.mxu0 %v498
  %v609 = vpop.f32.mrf.mxu0
  %v610 = vadd.f32 %v464, %v609
  %v611 = vpop.f32.mrf.mxu0
  %v612 = vpop.f32.mrf.mxu0
  %v613 = vadd.f32 %v464, %v612
  %v614 = vpop.f32.mrf.mxu0
  %615 = vmatprep.mubr.bf16.mxu0 0
  %616 = vmatmul.mubr.bf16.gmra.mxu0 %v501
  %v617 = vpop.f32.mrf.mxu0
  %v618 = vadd.f32 %v464, %v617
  %v619 = vpop.f32.mrf.mxu0
  %v620 = vpop.f32.mrf.mxu0
  %v621 = vadd.f32 %v464, %v620
  %v622 = vpop.f32.mrf.mxu0
  %623 = vmatprep.mubr.bf16.mxu0 0
  %624 = vmatmul.mubr.bf16.gmra.mxu0 %v504
  %v625 = vpop.f32.mrf.mxu0
  %v626 = vadd.f32 %v464, %v625
  %v627 = vpop.f32.mrf.mxu0
  %v628 = vpop.f32.mrf.mxu0
  %v629 = vadd.f32 %v464, %v628
  %v630 = vpop.f32.mrf.mxu0
  %631 = vmatprep.mubr.bf16.mxu0 0
  %632 = vmatmul.mubr.bf16.gmra.mxu0 %v507
  %v633 = vpop.f32.mrf.mxu0
  %v634 = vadd.f32 %v464, %v633
  %v635 = vpop.f32.mrf.mxu0
  %v636 = vpop.f32.mrf.mxu0
  %v637 = vadd.f32 %v464, %v636
  %v638 = vpop.f32.mrf.mxu0
  %639 = vmatprep.mubr.bf16.mxu0 0
  %640 = vmatmul.mubr.bf16.gmra.mxu0 %v510
  %v641 = vpop.f32.mrf.mxu0
  %v642 = vadd.f32 %v464, %v641
  %v643 = vpop.f32.mrf.mxu0
  %v644 = vpop.f32.mrf.mxu0
  %v645 = vadd.f32 %v464, %v644
  %v646 = vpop.f32.mrf.mxu0
  %647 = vmatprep.mubr.bf16.mxu0 0
  %648 = vmatmul.mubr.bf16.gmra.mxu0 %v513
  %v649 = vpop.f32.mrf.mxu0
  %v650 = vadd.f32 %v464, %v649
  %v651 = vpop.f32.mrf.mxu0
  %v652 = vpop.f32.mrf.mxu0
  %v653 = vadd.f32 %v464, %v652
  %v654 = vpop.f32.mrf.mxu0
  %655 = vmatprep.mubr.bf16.mxu0 0
  %656 = vmatmul.mubr.bf16.gmra.mxu0 %v516
  %v657 = vpop.f32.mrf.mxu0
  %v658 = vadd.f32 %v464, %v657
  %v659 = vpop.f32.mrf.mxu0
  %v660 = vpop.f32.mrf.mxu0
  %v661 = vadd.f32 %v464, %v660
  %v662 = vpop.f32.mrf.mxu0
  %663 = vmatprep.mubr.bf16.mxu0 0
  %664 = vmatmul.mubr.bf16.gmra.mxu0 %v519
  %v665 = vpop.f32.mrf.mxu0
  %v666 = vadd.f32 %v464, %v665
  %v667 = vpop.f32.mrf.mxu0
  %v668 = vpop.f32.mrf.mxu0
  %v669 = vadd.f32 %v464, %v668
  %v670 = vpop.f32.mrf.mxu0
  %671 = vmatprep.mubr.bf16.mxu0 0
  %672 = vmatmul.mubr.bf16.gmra.mxu0 %v522
  %v673 = vpop.f32.mrf.mxu0
  %v674 = vadd.f32 %v464, %v673
  %v675 = vpop.f32.mrf.mxu0
  %v676 = vpop.f32.mrf.mxu0
  %v677 = vadd.f32 %v464, %v676
  %v678 = vpop.f32.mrf.mxu0
  %679 = vmatprep.mubr.bf16.mxu0 0
  %680 = vmatmul.mubr.bf16.gmra.mxu0 %v525
  %v681 = vpop.f32.mrf.mxu0
  %v682 = vadd.f32 %v464, %v681
  %v683 = vpop.f32.mrf.mxu0
  %v684 = vpop.f32.mrf.mxu0
  %v685 = vadd.f32 %v464, %v684
  %v686 = vpop.f32.mrf.mxu0
  %687 = vdwg.mxu0
  %v688 = vmax.f32 %v562, 0.0
  %v689 = vmax.f32 %v565, 0.0
  %v690 = vmax.f32 %v570, 0.0
  %v691 = vmax.f32 %v573, 0.0
  %v692 = vmax.f32 %v578, 0.0
  %v693 = vmax.f32 %v581, 0.0
  %v694 = vmax.f32 %v586, 0.0
  %v695 = vmax.f32 %v589, 0.0
  %v696 = vmax.f32 %v594, 0.0
  %v697 = vmax.f32 %v597, 0.0
  %v698 = vmax.f32 %v602, 0.0
  %v699 = vmax.f32 %v605, 0.0
  %v700 = vmax.f32 %v610, 0.0
  %v701 = vmax.f32 %v613, 0.0
  %v702 = vmax.f32 %v618, 0.0
  %v703 = vmax.f32 %v621, 0.0
  %v704 = vmax.f32 %v626, 0.0
  %v705 = vmax.f32 %v629, 0.0
  %v706 = vmax.f32 %v634, 0.0
  %v707 = vmax.f32 %v637, 0.0
  %v708 = vmax.f32 %v642, 0.0
  %v709 = vmax.f32 %v645, 0.0
  %v710 = vmax.f32 %v650, 0.0
  %v711 = vmax.f32 %v653, 0.0
  %v712 = vmax.f32 %v658, 0.0
  %v713 = vmax.f32 %v661, 0.0
  %v714 = vmax.f32 %v666, 0.0
  %v715 = vmax.f32 %v669, 0.0
  %v716 = vmax.f32 %v674, 0.0
  %v717 = vmax.f32 %v677, 0.0
  %v718 = vmax.f32 %v682, 0.0
  %v719 = vmax.f32 %v685, 0.0
  %v720 = vpack.c.bf16 %v689, %v688
  %v721 = vpack.c.bf16 %v691, %v690
  %v722 = vpack.c.bf16 %v693, %v692
  %v723 = vpack.c.bf16 %v695, %v694
  %v724 = vpack.c.bf16 %v697, %v696
  %v725 = vpack.c.bf16 %v699, %v698
  %v726 = vpack.c.bf16 %v701, %v700
  %v727 = vpack.c.bf16 %v703, %v702
  %v728 = vpack.c.bf16 %v705, %v704
  %v729 = vpack.c.bf16 %v707, %v706
  %v730 = vpack.c.bf16 %v709, %v708
  %v731 = vpack.c.bf16 %v711, %v710
  %v732 = vpack.c.bf16 %v713, %v712
  %v733 = vpack.c.bf16 %v715, %v714
  %v734 = vpack.c.bf16 %v717, %v716
  %v735 = vpack.c.bf16 %v719, %v718
  %v737 = vlaneseq
  %v738 = vshrl.u32 %v737, 7
  %v739 = vsub.s32 0, %v738
  %v740 = vrot.slane %v82, %v739
  %v746 = vunpack.c.l.b16 %v78
  %v747 = vunpack.c.l.b16 %v79
  %v748 = vunpack.c.l.b16 %v80
  %v749 = vunpack.c.l.b16 %v81
  %v750 = vpack.c.b16 %v747, %v746
  %v751 = vpack.c.b16 %v749, %v748
  %v755 = vsel %vm478, %v720, 0
  %v758 = vsel %vm478, %v721, 0
  %v761 = vsel %vm478, %v722, 0
  %v764 = vsel %vm478, %v723, 0
  %v767 = vsel %vm478, %v724, 0
  %v770 = vsel %vm478, %v725, 0
  %v773 = vsel %vm478, %v726, 0
  %v776 = vsel %vm478, %v727, 0
  %v779 = vsel %vm478, %v728, 0
  %v782 = vsel %vm478, %v729, 0
  %v785 = vsel %vm478, %v730, 0
  %v788 = vsel %vm478, %v731, 0
  %v791 = vsel %vm478, %v732, 0
  %v794 = vsel %vm478, %v733, 0
  %v797 = vsel %vm478, %v734, 0
  %v800 = vsel %vm478, %v735, 0
  %802 = vmatprep.subr.bf16.mxu0 0
  %803 = vmatpush1.bf16.msra.mxu0 0
  %804 = vmatprep.subr.bf16.mxu0 0
  %805 = vmatpush1.bf16.msra.mxu0 0
  %806 = vmatprep.subr.bf16.mxu0 0
  %807 = vmatpush1.bf16.msra.mxu0 0
  %808 = vmatprep.subr.bf16.mxu0 0
  %809 = vmatpush1.bf16.msra.mxu0 0
  %810 = vmatprep.subr.bf16.mxu0 0
  %811 = vmatpush1.bf16.msra.mxu0 0
  %812 = vmatprep.subr.bf16.mxu0 0
  %813 = vmatpush1.bf16.msra.mxu0 0
  %814 = vmatprep.subr.bf16.mxu0 0
  %815 = vmatpush1.bf16.msra.mxu0 %v751
  %816 = vmatprep.subr.bf16.mxu0 0
  %817 = vmatpush1.bf16.msra.mxu0 %v750
  %818 = vmatprep.subr.bf16.mxu0 0
  %819 = vmatpush2.bf16.msra.mxu0 0
  %820 = vmatprep.subr.bf16.mxu0 0
  %821 = vmatpush2.bf16.msra.mxu0 0
  %822 = vmatprep.subr.bf16.mxu0 0
  %823 = vmatpush2.bf16.msra.mxu0 0
  %824 = vmatprep.subr.bf16.mxu0 0
  %825 = vmatpush2.bf16.msra.mxu0 0
  %826 = vmatprep.subr.bf16.mxu0 0
  %827 = vmatpush2.bf16.msra.mxu0 0
  %828 = vmatprep.subr.bf16.mxu0 0
  %829 = vmatpush2.bf16.msra.mxu0 0
  %830 = vmatprep.subr.bf16.mxu0 0
  %831 = vmatpush2.bf16.msra.mxu0 0
  %832 = vmatprep.subr.bf16.mxu0 0
  %833 = vmatpush2.bf16.msra.mxu0 0
  %834 = vmatprep.mubr.bf16.mxu0 0
  %835 = vmatmul.mubr.bf16.gmra.mxu0 %v755
  %v836 = vpop.f32.mrf.mxu0
  %v837 = vadd.f32 %v740, %v836
  %v838 = vpop.f32.mrf.mxu0
  %v839 = vpop.f32.mrf.mxu0
  %v840 = vadd.f32 %v740, %v839
  %v841 = vpop.f32.mrf.mxu0
  %842 = vmatprep.mubr.bf16.mxu0 0
  %843 = vmatmul.mubr.bf16.gmra.mxu0 %v758
  %v844 = vpop.f32.mrf.mxu0
  %v845 = vadd.f32 %v740, %v844
  %v846 = vpop.f32.mrf.mxu0
  %v847 = vpop.f32.mrf.mxu0
  %v848 = vadd.f32 %v740, %v847
  %v849 = vpop.f32.mrf.mxu0
  %850 = vmatprep.mubr.bf16.mxu0 0
  %851 = vmatmul.mubr.bf16.gmra.mxu0 %v761
  %v852 = vpop.f32.mrf.mxu0
  %v853 = vadd.f32 %v740, %v852
  %v854 = vpop.f32.mrf.mxu0
  %v855 = vpop.f32.mrf.mxu0
  %v856 = vadd.f32 %v740, %v855
  %v857 = vpop.f32.mrf.mxu0
  %858 = vmatprep.mubr.bf16.mxu0 0
  %859 = vmatmul.mubr.bf16.gmra.mxu0 %v764
  %v860 = vpop.f32.mrf.mxu0
  %v861 = vadd.f32 %v740, %v860
  %v862 = vpop.f32.mrf.mxu0
  %v863 = vpop.f32.mrf.mxu0
  %v864 = vadd.f32 %v740, %v863
  %v865 = vpop.f32.mrf.mxu0
  %866 = vmatprep.mubr.bf16.mxu0 0
  %867 = vmatmul.mubr.bf16.gmra.mxu0 %v767
  %v868 = vpop.f32.mrf.mxu0
  %v869 = vadd.f32 %v740, %v868
  %v870 = vpop.f32.mrf.mxu0
  %v871 = vpop.f32.mrf.mxu0
  %v872 = vadd.f32 %v740, %v871
  %v873 = vpop.f32.mrf.mxu0
  %874 = vmatprep.mubr.bf16.mxu0 0
  %875 = vmatmul.mubr.bf16.gmra.mxu0 %v770
  %v876 = vpop.f32.mrf.mxu0
  %v877 = vadd.f32 %v740, %v876
  %v878 = vpop.f32.mrf.mxu0
  %v879 = vpop.f32.mrf.mxu0
  %v880 = vadd.f32 %v740, %v879
  %v881 = vpop.f32.mrf.mxu0
  %882 = vmatprep.mubr.bf16.mxu0 0
  %883 = vmatmul.mubr.bf16.gmra.mxu0 %v773
  %v884 = vpop.f32.mrf.mxu0
  %v885 = vadd.f32 %v740, %v884
  %v886 = vpop.f32.mrf.mxu0
  %v887 = vpop.f32.mrf.mxu0
  %v888 = vadd.f32 %v740, %v887
  %v889 = vpop.f32.mrf.mxu0
  %890 = vmatprep.mubr.bf16.mxu0 0
  %891 = vmatmul.mubr.bf16.gmra.mxu0 %v776
  %v892 = vpop.f32.mrf.mxu0
  %v893 = vadd.f32 %v740, %v892
  %v894 = vpop.f32.mrf.mxu0
  %v895 = vpop.f32.mrf.mxu0
  %v896 = vadd.f32 %v740, %v895
  %v897 = vpop.f32.mrf.mxu0
  %898 = vmatprep.mubr.bf16.mxu0 0
  %899 = vmatmul.mubr.bf16.gmra.mxu0 %v779
  %v900 = vpop.f32.mrf.mxu0
  %v901 = vadd.f32 %v740, %v900
  %v902 = vpop.f32.mrf.mxu0
  %v903 = vpop.f32.mrf.mxu0
  %v904 = vadd.f32 %v740, %v903
  %v905 = vpop.f32.mrf.mxu0
  %906 = vmatprep.mubr.bf16.mxu0 0
  %907 = vmatmul.mubr.bf16.gmra.mxu0 %v782
  %v908 = vpop.f32.mrf.mxu0
  %v909 = vadd.f32 %v740, %v908
  %v910 = vpop.f32.mrf.mxu0
  %v911 = vpop.f32.mrf.mxu0
  %v912 = vadd.f32 %v740, %v911
  %v913 = vpop.f32.mrf.mxu0
  %914 = vmatprep.mubr.bf16.mxu0 0
  %915 = vmatmul.mubr.bf16.gmra.mxu0 %v785
  %v916 = vpop.f32.mrf.mxu0
  %v917 = vadd.f32 %v740, %v916
  %v918 = vpop.f32.mrf.mxu0
  %v919 = vpop.f32.mrf.mxu0
  %v920 = vadd.f32 %v740, %v919
  %v921 = vpop.f32.mrf.mxu0
  %922 = vmatprep.mubr.bf16.mxu0 0
  %923 = vmatmul.mubr.bf16.gmra.mxu0 %v788
  %v924 = vpop.f32.mrf.mxu0
  %v925 = vadd.f32 %v740, %v924
  %v926 = vpop.f32.mrf.mxu0
  %v927 = vpop.f32.mrf.mxu0
  %v928 = vadd.f32 %v740, %v927
  %v929 = vpop.f32.mrf.mxu0
  %930 = vmatprep.mubr.bf16.mxu0 0
  %931 = vmatmul.mubr.bf16.gmra.mxu0 %v791
  %v932 = vpop.f32.mrf.mxu0
  %v933 = vadd.f32 %v740, %v932
  %v934 = vpop.f32.mrf.mxu0
  %v935 = vpop.f32.mrf.mxu0
  %v936 = vadd.f32 %v740, %v935
  %v937 = vpop.f32.mrf.mxu0
  %938 = vmatprep.mubr.bf16.mxu0 0
  %939 = vmatmul.mubr.bf16.gmra.mxu0 %v794
  %v940 = vpop.f32.mrf.mxu0
  %v941 = vadd.f32 %v740, %v940
  %v942 = vpop.f32.mrf.mxu0
  %v943 = vpop.f32.mrf.mxu0
  %v944 = vadd.f32 %v740, %v943
  %v945 = vpop.f32.mrf.mxu0
  %946 = vmatprep.mubr.bf16.mxu0 0
  %947 = vmatmul.mubr.bf16.gmra.mxu0 %v797
  %v948 = vpop.f32.mrf.mxu0
  %v949 = vadd.f32 %v740, %v948
  %v950 = vpop.f32.mrf.mxu0
  %v951 = vpop.f32.mrf.mxu0
  %v952 = vadd.f32 %v740, %v951
  %v953 = vpop.f32.mrf.mxu0
  %954 = vmatprep.mubr.bf16.mxu0 0
  %955 = vmatmul.mubr.bf16.gmra.mxu0 %v800
  %v956 = vpop.f32.mrf.mxu0
  %v957 = vadd.f32 %v740, %v956
  %v958 = vpop.f32.mrf.mxu0
  %v959 = vpop.f32.mrf.mxu0
  %v960 = vadd.f32 %v740, %v959
  %v961 = vpop.f32.mrf.mxu0
  %962 = vdwg.mxu0
  %v963 = vld [vmem:[%s1] sm:$0xff]
  %v964 = vld [vmem:[%s1 + $0x8] sm:$0xff]
  %v965 = vld [vmem:[%s1 + $0x10] sm:$0xff]
  %v966 = vld [vmem:[%s1 + $0x18] sm:$0xff]
  %v967 = vld [vmem:[%s1 + $0x20] sm:$0xff]
  %v968 = vld [vmem:[%s1 + $0x28] sm:$0xff]
  %v969 = vld [vmem:[%s1 + $0x30] sm:$0xff]
  %v970 = vld [vmem:[%s1 + $0x38] sm:$0xff]
  %v971 = vld [vmem:[%s1 + $0x40] sm:$0xff]
  %v972 = vld [vmem:[%s1 + $0x48] sm:$0xff]
  %v973 = vld [vmem:[%s1 + $0x50] sm:$0xff]
  %v974 = vld [vmem:[%s1 + $0x58] sm:$0xff]
  %v975 = vld [vmem:[%s1 + $0x60] sm:$0xff]
  %v976 = vld [vmem:[%s1 + $0x68] sm:$0xff]
  %v977 = vld [vmem:[%s1 + $0x70] sm:$0xff]
  %v978 = vld [vmem:[%s1 + $0x78] sm:$0xff]
  %v979 = vld [vmem:[%s1 + $0x80] sm:$0xff]
  %v980 = vld [vmem:[%s1 + $0x88] sm:$0xff]
  %v981 = vld [vmem:[%s1 + $0x90] sm:$0xff]
  %v982 = vld [vmem:[%s1 + $0x98] sm:$0xff]
  %v983 = vld [vmem:[%s1 + $0xa0] sm:$0xff]
  %v984 = vld [vmem:[%s1 + $0xa8] sm:$0xff]
  %v985 = vld [vmem:[%s1 + $0xb0] sm:$0xff]
  %v986 = vld [vmem:[%s1 + $0xb8] sm:$0xff]
  %v987 = vld [vmem:[%s1 + $0xc0] sm:$0xff]
  %v988 = vld [vmem:[%s1 + $0xc8] sm:$0xff]
  %v989 = vld [vmem:[%s1 + $0xd0] sm:$0xff]
  %v990 = vld [vmem:[%s1 + $0xd8] sm:$0xff]
  %v991 = vld [vmem:[%s1 + $0xe0] sm:$0xff]
  %v992 = vld [vmem:[%s1 + $0xe8] sm:$0xff]
  %v993 = vld [vmem:[%s1 + $0xf0] sm:$0xff]
  %v994 = vld [vmem:[%s1 + $0xf8] sm:$0xff]
  %996 = vset.pattern.permute.xlu0 0
  %997 = vperm.xlu0 %996, %v963
  %v998 = vpop.permute.xlu0 %997
  %1001 = vset.pattern.permute.xlu0 0
  %1002 = vperm.xlu0 %1001, %v964
  %v1003 = vpop.permute.xlu0 %1002
  %1006 = vset.pattern.permute.xlu0 0
  %1007 = vperm.xlu0 %1006, %v965
  %v1008 = vpop.permute.xlu0 %1007
  %1011 = vset.pattern.permute.xlu0 0
  %1012 = vperm.xlu0 %1011, %v966
  %v1013 = vpop.permute.xlu0 %1012
  %1016 = vset.pattern.permute.xlu0 0
  %1017 = vperm.xlu0 %1016, %v967
  %v1018 = vpop.permute.xlu0 %1017
  %1021 = vset.pattern.permute.xlu0 0
  %1022 = vperm.xlu0 %1021, %v968
  %v1023 = vpop.permute.xlu0 %1022
  %1026 = vset.pattern.permute.xlu0 0
  %1027 = vperm.xlu0 %1026, %v969
  %v1028 = vpop.permute.xlu0 %1027
  %1031 = vset.pattern.permute.xlu0 0
  %1032 = vperm.xlu0 %1031, %v970
  %v1033 = vpop.permute.xlu0 %1032
  %1036 = vset.pattern.permute.xlu0 0
  %1037 = vperm.xlu0 %1036, %v971
  %v1038 = vpop.permute.xlu0 %1037
  %1041 = vset.pattern.permute.xlu0 0
  %1042 = vperm.xlu0 %1041, %v972
  %v1043 = vpop.permute.xlu0 %1042
  %1046 = vset.pattern.permute.xlu0 0
  %1047 = vperm.xlu0 %1046, %v973
  %v1048 = vpop.permute.xlu0 %1047
  %1051 = vset.pattern.permute.xlu0 0
  %1052 = vperm.xlu0 %1051, %v974
  %v1053 = vpop.permute.xlu0 %1052
  %1056 = vset.pattern.permute.xlu0 0
  %1057 = vperm.xlu0 %1056, %v975
  %v1058 = vpop.permute.xlu0 %1057
  %1061 = vset.pattern.permute.xlu0 0
  %1062 = vperm.xlu0 %1061, %v976
  %v1063 = vpop.permute.xlu0 %1062
  %1066 = vset.pattern.permute.xlu0 0
  %1067 = vperm.xlu0 %1066, %v977
  %v1068 = vpop.permute.xlu0 %1067
  %1071 = vset.pattern.permute.xlu0 0
  %1072 = vperm.xlu0 %1071, %v978
  %v1073 = vpop.permute.xlu0 %1072
  %1076 = vset.pattern.permute.xlu0 0
  %1077 = vperm.xlu0 %1076, %v979
  %v1078 = vpop.permute.xlu0 %1077
  %1081 = vset.pattern.permute.xlu0 0
  %1082 = vperm.xlu0 %1081, %v980
  %v1083 = vpop.permute.xlu0 %1082
  %1086 = vset.pattern.permute.xlu0 0
  %1087 = vperm.xlu0 %1086, %v981
  %v1088 = vpop.permute.xlu0 %1087
  %1091 = vset.pattern.permute.xlu0 0
  %1092 = vperm.xlu0 %1091, %v982
  %v1093 = vpop.permute.xlu0 %1092
  %1096 = vset.pattern.permute.xlu0 0
  %1097 = vperm.xlu0 %1096, %v983
  %v1098 = vpop.permute.xlu0 %1097
  %1101 = vset.pattern.permute.xlu0 0
  %1102 = vperm.xlu0 %1101, %v984
  %v1103 = vpop.permute.xlu0 %1102
  %1106 = vset.pattern.permute.xlu0 0
  %1107 = vperm.xlu0 %1106, %v985
  %v1108 = vpop.permute.xlu0 %1107
  %1111 = vset.pattern.permute.xlu0 0
  %1112 = vperm.xlu0 %1111, %v986
  %v1113 = vpop.permute.xlu0 %1112
  %1116 = vset.pattern.permute.xlu0 0
  %1117 = vperm.xlu0 %1116, %v987
  %v1118 = vpop.permute.xlu0 %1117
  %1121 = vset.pattern.permute.xlu0 0
  %1122 = vperm.xlu0 %1121, %v988
  %v1123 = vpop.permute.xlu0 %1122
  %1126 = vset.pattern.permute.xlu0 0
  %1127 = vperm.xlu0 %1126, %v989
  %v1128 = vpop.permute.xlu0 %1127
  %1131 = vset.pattern.permute.xlu0 0
  %1132 = vperm.xlu0 %1131, %v990
  %v1133 = vpop.permute.xlu0 %1132
  %1136 = vset.pattern.permute.xlu0 0
  %1137 = vperm.xlu0 %1136, %v991
  %v1138 = vpop.permute.xlu0 %1137
  %1141 = vset.pattern.permute.xlu0 0
  %1142 = vperm.xlu0 %1141, %v992
  %v1143 = vpop.permute.xlu0 %1142
  %1146 = vset.pattern.permute.xlu0 0
  %1147 = vperm.xlu0 %1146, %v993
  %v1148 = vpop.permute.xlu0 %1147
  %1151 = vset.pattern.permute.xlu0 0
  %1152 = vperm.xlu0 %1151, %v994
  %v1153 = vpop.permute.xlu0 %1152
  %v1155 = vmul.f32 %v837, %v998
  %v1156 = vmul.f32 %v840, %v1003
  %v1157 = vmul.f32 %v845, %v1008
  %v1158 = vmul.f32 %v848, %v1013
  %v1159 = vmul.f32 %v853, %v1018
  %v1160 = vmul.f32 %v856, %v1023
  %v1161 = vmul.f32 %v861, %v1028
  %v1162 = vmul.f32 %v864, %v1033
  %v1163 = vmul.f32 %v869, %v1038
  %v1164 = vmul.f32 %v872, %v1043
  %v1165 = vmul.f32 %v877, %v1048
  %v1166 = vmul.f32 %v880, %v1053
  %v1167 = vmul.f32 %v885, %v1058
  %v1168 = vmul.f32 %v888, %v1063
  %v1169 = vmul.f32 %v893, %v1068
  %v1170 = vmul.f32 %v896, %v1073
  %v1171 = vmul.f32 %v901, %v1078
  %v1172 = vmul.f32 %v904, %v1083
  %v1173 = vmul.f32 %v909, %v1088
  %v1174 = vmul.f32 %v912, %v1093
  %v1175 = vmul.f32 %v917, %v1098
  %v1176 = vmul.f32 %v920, %v1103
  %v1177 = vmul.f32 %v925, %v1108
  %v1178 = vmul.f32 %v928, %v1113
  %v1179 = vmul.f32 %v933, %v1118
  %v1180 = vmul.f32 %v936, %v1123
  %v1181 = vmul.f32 %v941, %v1128
  %v1182 = vmul.f32 %v944, %v1133
  %v1183 = vmul.f32 %v949, %v1138
  %v1184 = vmul.f32 %v952, %v1143
  %v1185 = vmul.f32 %v957, %v1148
  %v1186 = vmul.f32 %v960, %v1153
  %vm1187 = vcmask 64512
  %v1188 = vsel %vm1187, %v1155, 0.0
  %v1189 = vsel %vm1187, %v1163, 0.0
  %v1190 = vadd.f32 %v1188, %v1189
  %v1191 = vsel %vm1187, %v1171, 0.0
  %v1192 = vadd.f32 %v1190, %v1191
  %v1193 = vsel %vm1187, %v1179, 0.0
  %v1194 = vadd.f32 %v1192, %v1193
  %v1195 = vsel %vm1187, %v1156, 0.0
  %v1196 = vsel %vm1187, %v1164, 0.0
  %v1197 = vadd.f32 %v1195, %v1196
  %v1198 = vsel %vm1187, %v1172, 0.0
  %v1199 = vadd.f32 %v1197, %v1198
  %v1200 = vsel %vm1187, %v1180, 0.0
  %v1201 = vadd.f32 %v1199, %v1200
  %v1202 = vsel %vm1187, %v1157, 0.0
  %v1203 = vsel %vm1187, %v1165, 0.0
  %v1204 = vadd.f32 %v1202, %v1203
  %v1205 = vsel %vm1187, %v1173, 0.0
  %v1206 = vadd.f32 %v1204, %v1205
  %v1207 = vsel %vm1187, %v1181, 0.0
  %v1208 = vadd.f32 %v1206, %v1207
  %v1209 = vsel %vm1187, %v1158, 0.0
  %v1210 = vsel %vm1187, %v1166, 0.0
  %v1211 = vadd.f32 %v1209, %v1210
  %v1212 = vsel %vm1187, %v1174, 0.0
  %v1213 = vadd.f32 %v1211, %v1212
  %v1214 = vsel %vm1187, %v1182, 0.0
  %v1215 = vadd.f32 %v1213, %v1214
  %v1216 = vsel %vm1187, %v1159, 0.0
  %v1217 = vsel %vm1187, %v1167, 0.0
  %v1218 = vadd.f32 %v1216, %v1217
  %v1219 = vsel %vm1187, %v1175, 0.0
  %v1220 = vadd.f32 %v1218, %v1219
  %v1221 = vsel %vm1187, %v1183, 0.0
  %v1222 = vadd.f32 %v1220, %v1221
  %v1223 = vsel %vm1187, %v1160, 0.0
  %v1224 = vsel %vm1187, %v1168, 0.0
  %v1225 = vadd.f32 %v1223, %v1224
  %v1226 = vsel %vm1187, %v1176, 0.0
  %v1227 = vadd.f32 %v1225, %v1226
  %v1228 = vsel %vm1187, %v1184, 0.0
  %v1229 = vadd.f32 %v1227, %v1228
  %v1230 = vsel %vm1187, %v1161, 0.0
  %v1231 = vsel %vm1187, %v1169, 0.0
  %v1232 = vadd.f32 %v1230, %v1231
  %v1233 = vsel %vm1187, %v1177, 0.0
  %v1234 = vadd.f32 %v1232, %v1233
  %v1235 = vsel %vm1187, %v1185, 0.0
  %v1236 = vadd.f32 %v1234, %v1235
  %v1237 = vsel %vm1187, %v1162, 0.0
  %v1238 = vsel %vm1187, %v1170, 0.0
  %v1239 = vadd.f32 %v1237, %v1238
  %v1240 = vsel %vm1187, %v1178, 0.0
  %v1241 = vadd.f32 %v1239, %v1240
  %v1242 = vsel %vm1187, %v1186, 0.0
  %v1243 = vadd.f32 %v1241, %v1242
  %v1244 = vtanh.pop %v1194
  %v1245 = vtanh.pop %v1201
  %v1246 = vtanh.pop %v1208
  %v1247 = vtanh.pop %v1215
  %v1248 = vtanh.pop %v1222
  %v1249 = vtanh.pop %v1229
  %v1250 = vtanh.pop %v1236
  %v1251 = vtanh.pop %v1243
  %v1252 = vmul.f32 %v1244, 1.01
  %v1253 = vmul.f32 %v1245, 1.01
  %v1254 = vmul.f32 %v1246, 1.01
  %v1255 = vmul.f32 %v1247, 1.01
  %v1256 = vmul.f32 %v1248, 1.01
  %v1257 = vmul.f32 %v1249, 1.01
  %v1258 = vmul.f32 %v1250, 1.01
  %v1259 = vmul.f32 %v1251, 1.01
  %1260 = vst.msk [vmem:[%s8] sm:$0xff] %vm1187, %v1252
  %1261 = vst.msk [vmem:[%s8 + $0x8] sm:$0xff] %vm1187, %v1253
  %1262 = vst.msk [vmem:[%s8 + $0x10] sm:$0xff] %vm1187, %v1254
  %1263 = vst.msk [vmem:[%s8 + $0x18] sm:$0xff] %vm1187, %v1255
  %1264 = vst.msk [vmem:[%s8 + $0x20] sm:$0xff] %vm1187, %v1256
  %1265 = vst.msk [vmem:[%s8 + $0x28] sm:$0xff] %vm1187, %v1257
  %1266 = vst.msk [vmem:[%s8 + $0x30] sm:$0xff] %vm1187, %v1258
  %1267 = vst.msk [vmem:[%s8 + $0x38] sm:$0xff] %vm1187, %v1259
  // Predicated region
  $region34: #{liif_forward.3} parent=0 // pred_check
    _
  $region35: #{liif_forward.3} parent=0 // pred_check_branch
    %1269 = sbr.rel (0) target = $region37
  $region36: #{liif_forward.3} parent=0 // pred_region
    _
  $region37: #{liif_forward.3} parent=0 // pred_fallthru
    _
  // Predicated region
  $region38: #{liif_forward.3} parent=0 // pred_check
    _
  $region39: #{liif_forward.3} parent=0 // pred_check_branch
    %1271 = sbr.rel (0) target = $region41
  $region40: #{liif_forward.3} parent=0 // pred_region
    _
  $region41: #{liif_forward.3} parent=0 // pred_fallthru
    _

</llo_original>
